<compile_context>
chip_gen: v6e
topology: v6e:2x2x1
jax: 0.10.0
libtpu: 0.0.40
codegen_flags: <defaults>
</compile_context>

<pallas_src>
import jax
import jax.numpy as jnp
from jax.experimental import pallas as pl
from jax.experimental.pallas import tpu as pltpu


def _conv3_rows(h, w_ref):
    """3-tap conv along rows: h is (R, Kin) f32, w_ref is a (3, Kin, Kout) ref."""
    R = h.shape[0]
    row = jax.lax.broadcasted_iota(jnp.int32, h.shape, 0)
    # h_dn[r] = h[r-1] (zero at top border), h_up[r] = h[r+1] (zero at bottom).
    h_dn = jnp.where(row == 0, 0.0, pltpu.roll(h, shift=1, axis=0))
    h_up = jnp.where(row == R - 1, 0.0, pltpu.roll(h, shift=R - 1, axis=0))
    acc = jnp.dot(h_dn, w_ref[0], preferred_element_type=jnp.float32)
    acc = acc + jnp.dot(h, w_ref[1], preferred_element_type=jnp.float32)
    acc = acc + jnp.dot(h_up, w_ref[2], preferred_element_type=jnp.float32)
    return acc


def _segnet_up2_kernel(x_ref, w1_ref, b1_ref, w2_ref, b2_ref, out_ref):
    # x_ref: (1, H2, W*Cin) H-upsampled input; w*_ref: (3, Kin, Kout) bands;
    # b*_ref: (1, Kout); out_ref: (1, H2, W2*Cout).
    x = x_ref[0].astype(jnp.float32)
    h1 = jnp.maximum(_conv3_rows(x, w1_ref) + b1_ref[...], 0.0)
    h2 = jnp.maximum(_conv3_rows(h1, w2_ref) + b2_ref[...], 0.0)
    out_ref[0] = h2.astype(out_ref.dtype)


def _fold_bn(w, b, gamma, beta, mean, var, eps):
    """Fold inference BatchNorm into conv weight (OIHW) and bias."""
    s = gamma / jnp.sqrt(var + eps)
    w_f = w * s[:, None, None, None]
    b_f = s * (b - mean) + beta
    return w_f.astype(jnp.float32), b_f.astype(jnp.float32)


def _banded_weights(w_fold, w_in_size, w_out_size, upsample):
    """(Cout, Cin, 3, 3) OIHW weights -> (3, w_in_size*Cin, w_out_size*Cout).

    Output column w_out taps (upsampled) column u = w_out + kw - 1; a valid u
    maps to input column u // upsample (nearest-neighbour upsample absorbed).
    The kw shifts and W-direction zero padding live in the band structure.
    """
    c_out, c_in = w_fold.shape[0], w_fold.shape[1]
    w_in_idx = jnp.arange(w_in_size)[:, None]      # (Win, 1)
    w_out_idx = jnp.arange(w_out_size)[None, :]    # (1, Wout)
    bands = []
    for kh in range(3):
        band = jnp.zeros((w_in_size, c_in, w_out_size, c_out), jnp.float32)
        for kw in range(3):
            u = w_out_idx + (kw - 1)               # tapped (upsampled) column
            valid = (u >= 0) & (u < w_out_size)
            mask = (valid & (u // upsample == w_in_idx)).astype(jnp.float32)
            blk = w_fold[:, :, kh, kw].T           # (Cin, Cout)
            band = band + mask[:, None, :, None] * blk[None, :, None, :]
        bands.append(band.reshape(w_in_size * c_in, w_out_size * c_out))
    return jnp.stack(bands, axis=0)


def segnet_up2(x, params, *, eps=1e-5):
    """segnetUp2 forward. x: (B, Cin, H, W) NCHW -> (B, Cout, 2H, 2W)."""
    (w1, b1, g1, be1, m1, v1, w2, b2, g2, be2, m2, v2) = params
    B, c_in, H, W = x.shape
    c_mid = w1.shape[0]
    c_out = w2.shape[0]
    H2, W2 = 2 * H, 2 * W
    K1, Km, K2 = W * c_in, W2 * c_mid, W2 * c_out

    # Fold BN into the convs; build banded weights and tiled bias rows.
    wf1, bf1 = _fold_bn(w1, b1, g1, be1, m1, v1, eps)
    wf2, bf2 = _fold_bn(w2, b2, g2, be2, m2, v2, eps)
    wb1 = _banded_weights(wf1, W, W2, upsample=2)   # (3, K1, Km)  W-upsample folded
    wb2 = _banded_weights(wf2, W2, W2, upsample=1)  # (3, Km, K2)
    b1row = jnp.tile(bf1, W2)[None, :]              # (1, Km)
    b2row = jnp.tile(bf2, W2)[None, :]              # (1, K2)

    # NCHW -> NHWC, nearest x2 upsample along H only (W-upsample is in wb1),
    # flatten (W, C) into one lane axis.
    x_nhwc = jnp.transpose(x, (0, 2, 3, 1))
    x_up_h = jnp.repeat(x_nhwc, 2, axis=1)
    x2d = x_up_h.reshape(B, H2, K1).astype(jnp.float32)

    flops = 2 * B * 3 * H2 * (K1 * Km + Km * K2)
    bytes_accessed = 4 * (B * H2 * K1 + 3 * K1 * Km + Km
                          + 3 * Km * K2 + K2 + B * H2 * K2)

    out2d = pl.pallas_call(
        _segnet_up2_kernel,
        out_shape=jax.ShapeDtypeStruct((B, H2, K2), jnp.float32),
        grid_spec=pltpu.PrefetchScalarGridSpec(
            num_scalar_prefetch=0,
            grid=(B,),
            in_specs=[
                pl.BlockSpec((1, H2, K1), lambda b: (b, 0, 0)),
                pl.BlockSpec((3, K1, Km), lambda b: (0, 0, 0)),
                pl.BlockSpec((1, Km), lambda b: (0, 0)),
                pl.BlockSpec((3, Km, K2), lambda b: (0, 0, 0)),
                pl.BlockSpec((1, K2), lambda b: (0, 0)),
            ],
            out_specs=pl.BlockSpec((1, H2, K2), lambda b: (b, 0, 0)),
        ),
        compiler_params=pltpu.CompilerParams(
            dimension_semantics=("parallel",)),
        cost_estimate=pl.CostEstimate(
            flops=flops, transcendentals=0, bytes_accessed=bytes_accessed),
    )(x2d, wb1, b1row, wb2, b2row)

    out = out2d.reshape(B, H2, W2, c_out)
    return jnp.transpose(out, (0, 3, 1, 2))   # back to NCHW like PyTorch


def _reference(x, params, *, eps=1e-5):
    """Plain-JAX reference matching the PyTorch module (inference BN)."""
    (w1, b1, g1, be1, m1, v1, w2, b2, g2, be2, m2, v2) = params

    def cbr(z, w, b, g, be, m, v):
        y = jax.lax.conv_general_dilated(
            z, w, window_strides=(1, 1), padding=((1, 1), (1, 1)),
            dimension_numbers=("NCHW", "OIHW", "NCHW"),
            precision=jax.lax.Precision.HIGHEST)
        y = y + b[None, :, None, None]
        y = (y - m[None, :, None, None]) / jnp.sqrt(v[None, :, None, None] + eps)
        y = y * g[None, :, None, None] + be[None, :, None, None]
        return jnp.maximum(y, 0.0)

    xu = jnp.repeat(jnp.repeat(x, 2, axis=2), 2, axis=3)  # nearest x2
    return cbr(cbr(xu, w1, b1, g1, be1, m1, v1), w2, b2, g2, be2, m2, v2)


if __name__ == "__main__":
    key = jax.random.PRNGKey(0)
    ks = jax.random.split(key, 13)
    B, c_in, c_out, H, W = 2, 4, 8, 16, 16

    x = jax.random.normal(ks[0], (B, c_in, H, W), jnp.float32)
    w1 = 0.2 * jax.random.normal(ks[1], (c_in, c_in, 3, 3), jnp.float32)
    b1 = 0.1 * jax.random.normal(ks[2], (c_in,), jnp.float32)
    g1 = 1.0 + 0.1 * jax.random.normal(ks[3], (c_in,), jnp.float32)
    be1 = 0.1 * jax.random.normal(ks[4], (c_in,), jnp.float32)
    m1 = 0.1 * jax.random.normal(ks[5], (c_in,), jnp.float32)
    v1 = jax.random.uniform(ks[6], (c_in,), jnp.float32, 0.5, 1.5)
    w2 = 0.2 * jax.random.normal(ks[7], (c_out, c_in, 3, 3), jnp.float32)
    b2 = 0.1 * jax.random.normal(ks[8], (c_out,), jnp.float32)
    g2 = 1.0 + 0.1 * jax.random.normal(ks[9], (c_out,), jnp.float32)
    be2 = 0.1 * jax.random.normal(ks[10], (c_out,), jnp.float32)
    m2 = 0.1 * jax.random.normal(ks[11], (c_out,), jnp.float32)
    v2 = jax.random.uniform(ks[12], (c_out,), jnp.float32, 0.5, 1.5)

    params = (w1, b1, g1, be1, m1, v1, w2, b2, g2, be2, m2, v2)

    out = jax.jit(segnet_up2)(x, params)
    out = jax.block_until_ready(out)

    ref = _reference(x, params)
    assert out.shape == (B, c_out, 2 * H, 2 * W), out.shape
    max_err = float(jnp.max(jnp.abs(out - ref)))
    assert jnp.allclose(out, ref, rtol=2e-2, atol=2e-2), max_err

    print("KERNEL_OK")
</pallas_src>

<mosaic_0001>
module attributes {stable_mosaic.version = 11 : i64} {
  func.func @_segnet_up2_kernel(%arg0: i32, %arg1: memref<1x32x64xf32, #tpu.memory_space<vmem>>, %arg2: memref<3x64x128xf32, #tpu.memory_space<vmem>>, %arg3: memref<1x128xf32, #tpu.memory_space<vmem>>, %arg4: memref<3x128x256xf32, #tpu.memory_space<vmem>>, %arg5: memref<1x256xf32, #tpu.memory_space<vmem>>, %arg6: memref<1x32x256xf32, #tpu.memory_space<vmem>>) attributes {dimension_semantics = [#tpu.dimension_semantics<parallel>], iteration_bounds = array<i64: 2>, scalar_prefetch = 0 : i64, scratch_operands = 0 : i64, tpu.core_type = #tpu.core_type<tc>, window_params = [{transform_indices = @transform_0, window_bounds = array<i64: 1, 32, 64>}, {pipeline_mode = #tpu.pipeline_mode<synchronous>, transform_indices = @transform_1, window_bounds = array<i64: 3, 64, 128>}, {pipeline_mode = #tpu.pipeline_mode<synchronous>, transform_indices = @transform_2, window_bounds = array<i64: 1, 128>}, {pipeline_mode = #tpu.pipeline_mode<synchronous>, transform_indices = @transform_3, window_bounds = array<i64: 3, 128, 256>}, {pipeline_mode = #tpu.pipeline_mode<synchronous>, transform_indices = @transform_4, window_bounds = array<i64: 1, 256>}, {transform_indices = @transform_5, window_bounds = array<i64: 1, 32, 256>}]} {
    %c0 = arith.constant 0 : index
    %c0_0 = arith.constant 0 : index
    %c0_1 = arith.constant 0 : index
    %0 = vector.load %arg1[%c0, %c0_0, %c0_1] : memref<1x32x64xf32, #tpu.memory_space<vmem>>, vector<1x32x64xf32>
    %1 = vector.shape_cast %0 : vector<1x32x64xf32> to vector<32x64xf32>
    %2 = tpu.iota {dimensions = array<i32: 0>} : vector<32x64xi32>
    %c0_i32 = arith.constant 0 : i32
    %3 = vector.broadcast %c0_i32 : i32 to vector<32x64xi32>
    %4 = arith.cmpi eq, %2, %3 : vector<32x64xi32>
    %c1_i32 = arith.constant 1 : i32
    %5 = tpu.dynamic_rotate %1 by %c1_i32 dim 0 : vector<32x64xf32>, i32 -> vector<32x64xf32>
    %cst = arith.constant 0.000000e+00 : f32
    %6 = vector.broadcast %cst : f32 to vector<32x64xf32>
    %7 = arith.select %4, %6, %5 : vector<32x64xi1>, vector<32x64xf32>
    %c31_i32 = arith.constant 31 : i32
    %8 = vector.broadcast %c31_i32 : i32 to vector<32x64xi32>
    %9 = arith.cmpi eq, %2, %8 : vector<32x64xi32>
    %c31_i32_2 = arith.constant 31 : i32
    %10 = tpu.dynamic_rotate %1 by %c31_i32_2 dim 0 : vector<32x64xf32>, i32 -> vector<32x64xf32>
    %cst_3 = arith.constant 0.000000e+00 : f32
    %11 = vector.broadcast %cst_3 : f32 to vector<32x64xf32>
    %12 = arith.select %9, %11, %10 : vector<32x64xi1>, vector<32x64xf32>
    %c0_4 = arith.constant 0 : index
    %c0_5 = arith.constant 0 : index
    %c0_6 = arith.constant 0 : index
    %13 = vector.load %arg2[%c0_4, %c0_5, %c0_6] : memref<3x64x128xf32, #tpu.memory_space<vmem>>, vector<1x64x128xf32>
    %14 = vector.shape_cast %13 : vector<1x64x128xf32> to vector<64x128xf32>
    %cst_7 = arith.constant dense<0.000000e+00> : vector<32x128xf32>
    %15 = tpu.matmul %7, %14, %cst_7 {dimension_numbers = #tpu.dot_dimension_numbers<[1], [0], [0], [1], [0, 0, 1, 1], [], []>} : vector<32x64xf32>, vector<64x128xf32>, vector<32x128xf32> -> vector<32x128xf32>
    %c1 = arith.constant 1 : index
    %c0_8 = arith.constant 0 : index
    %c0_9 = arith.constant 0 : index
    %16 = vector.load %arg2[%c1, %c0_8, %c0_9] : memref<3x64x128xf32, #tpu.memory_space<vmem>>, vector<1x64x128xf32>
    %17 = vector.shape_cast %16 : vector<1x64x128xf32> to vector<64x128xf32>
    %cst_10 = arith.constant dense<0.000000e+00> : vector<32x128xf32>
    %18 = tpu.matmul %1, %17, %cst_10 {dimension_numbers = #tpu.dot_dimension_numbers<[1], [0], [0], [1], [0, 0, 1, 1], [], []>} : vector<32x64xf32>, vector<64x128xf32>, vector<32x128xf32> -> vector<32x128xf32>
    %19 = arith.addf %15, %18 : vector<32x128xf32>
    %c2 = arith.constant 2 : index
    %c0_11 = arith.constant 0 : index
    %c0_12 = arith.constant 0 : index
    %20 = vector.load %arg2[%c2, %c0_11, %c0_12] : memref<3x64x128xf32, #tpu.memory_space<vmem>>, vector<1x64x128xf32>
    %21 = vector.shape_cast %20 : vector<1x64x128xf32> to vector<64x128xf32>
    %cst_13 = arith.constant dense<0.000000e+00> : vector<32x128xf32>
    %22 = tpu.matmul %12, %21, %cst_13 {dimension_numbers = #tpu.dot_dimension_numbers<[1], [0], [0], [1], [0, 0, 1, 1], [], []>} : vector<32x64xf32>, vector<64x128xf32>, vector<32x128xf32> -> vector<32x128xf32>
    %23 = arith.addf %19, %22 : vector<32x128xf32>
    %c0_14 = arith.constant 0 : index
    %c0_15 = arith.constant 0 : index
    %24 = vector.load %arg3[%c0_14, %c0_15] : memref<1x128xf32, #tpu.memory_space<vmem>>, vector<1x128xf32>
    %25 = vector.broadcast %24 : vector<1x128xf32> to vector<32x128xf32>
    %26 = arith.addf %23, %25 : vector<32x128xf32>
    %cst_16 = arith.constant 0.000000e+00 : f32
    %27 = vector.broadcast %cst_16 : f32 to vector<32x128xf32>
    %28 = arith.maximumf %26, %27 : vector<32x128xf32>
    %29 = tpu.iota {dimensions = array<i32: 0>} : vector<32x128xi32>
    %c0_i32_17 = arith.constant 0 : i32
    %30 = vector.broadcast %c0_i32_17 : i32 to vector<32x128xi32>
    %31 = arith.cmpi eq, %29, %30 : vector<32x128xi32>
    %c1_i32_18 = arith.constant 1 : i32
    %32 = tpu.dynamic_rotate %28 by %c1_i32_18 dim 0 : vector<32x128xf32>, i32 -> vector<32x128xf32>
    %cst_19 = arith.constant 0.000000e+00 : f32
    %33 = vector.broadcast %cst_19 : f32 to vector<32x128xf32>
    %34 = arith.select %31, %33, %32 : vector<32x128xi1>, vector<32x128xf32>
    %c31_i32_20 = arith.constant 31 : i32
    %35 = vector.broadcast %c31_i32_20 : i32 to vector<32x128xi32>
    %36 = arith.cmpi eq, %29, %35 : vector<32x128xi32>
    %c31_i32_21 = arith.constant 31 : i32
    %37 = tpu.dynamic_rotate %28 by %c31_i32_21 dim 0 : vector<32x128xf32>, i32 -> vector<32x128xf32>
    %cst_22 = arith.constant 0.000000e+00 : f32
    %38 = vector.broadcast %cst_22 : f32 to vector<32x128xf32>
    %39 = arith.select %36, %38, %37 : vector<32x128xi1>, vector<32x128xf32>
    %c0_23 = arith.constant 0 : index
    %c0_24 = arith.constant 0 : index
    %c0_25 = arith.constant 0 : index
    %40 = vector.load %arg4[%c0_23, %c0_24, %c0_25] : memref<3x128x256xf32, #tpu.memory_space<vmem>>, vector<1x128x256xf32>
    %41 = vector.shape_cast %40 : vector<1x128x256xf32> to vector<128x256xf32>
    %cst_26 = arith.constant dense<0.000000e+00> : vector<32x256xf32>
    %42 = tpu.matmul %34, %41, %cst_26 {dimension_numbers = #tpu.dot_dimension_numbers<[1], [0], [0], [1], [0, 0, 1, 1], [], []>} : vector<32x128xf32>, vector<128x256xf32>, vector<32x256xf32> -> vector<32x256xf32>
    %c1_27 = arith.constant 1 : index
    %c0_28 = arith.constant 0 : index
    %c0_29 = arith.constant 0 : index
    %43 = vector.load %arg4[%c1_27, %c0_28, %c0_29] : memref<3x128x256xf32, #tpu.memory_space<vmem>>, vector<1x128x256xf32>
    %44 = vector.shape_cast %43 : vector<1x128x256xf32> to vector<128x256xf32>
    %cst_30 = arith.constant dense<0.000000e+00> : vector<32x256xf32>
    %45 = tpu.matmul %28, %44, %cst_30 {dimension_numbers = #tpu.dot_dimension_numbers<[1], [0], [0], [1], [0, 0, 1, 1], [], []>} : vector<32x128xf32>, vector<128x256xf32>, vector<32x256xf32> -> vector<32x256xf32>
    %46 = arith.addf %42, %45 : vector<32x256xf32>
    %c2_31 = arith.constant 2 : index
    %c0_32 = arith.constant 0 : index
    %c0_33 = arith.constant 0 : index
    %47 = vector.load %arg4[%c2_31, %c0_32, %c0_33] : memref<3x128x256xf32, #tpu.memory_space<vmem>>, vector<1x128x256xf32>
    %48 = vector.shape_cast %47 : vector<1x128x256xf32> to vector<128x256xf32>
    %cst_34 = arith.constant dense<0.000000e+00> : vector<32x256xf32>
    %49 = tpu.matmul %39, %48, %cst_34 {dimension_numbers = #tpu.dot_dimension_numbers<[1], [0], [0], [1], [0, 0, 1, 1], [], []>} : vector<32x128xf32>, vector<128x256xf32>, vector<32x256xf32> -> vector<32x256xf32>
    %50 = arith.addf %46, %49 : vector<32x256xf32>
    %c0_35 = arith.constant 0 : index
    %c0_36 = arith.constant 0 : index
    %51 = vector.load %arg5[%c0_35, %c0_36] : memref<1x256xf32, #tpu.memory_space<vmem>>, vector<1x256xf32>
    %52 = vector.broadcast %51 : vector<1x256xf32> to vector<32x256xf32>
    %53 = arith.addf %50, %52 : vector<32x256xf32>
    %cst_37 = arith.constant 0.000000e+00 : f32
    %54 = vector.broadcast %cst_37 : f32 to vector<32x256xf32>
    %55 = arith.maximumf %53, %54 : vector<32x256xf32>
    %c0_38 = arith.constant 0 : index
    %c0_39 = arith.constant 0 : index
    %c0_40 = arith.constant 0 : index
    %56 = vector.load %arg6[%c0_38, %c0_39, %c0_40] : memref<1x32x256xf32, #tpu.memory_space<vmem>>, vector<1x32x256xf32>
    %57 = vector.shape_cast %56 : vector<1x32x256xf32> to vector<32x256xf32>
    %58 = vector.shape_cast %55 : vector<32x256xf32> to vector<1x32x256xf32>
    tpu.vector_store %arg6[%c0_38, %c0_39, %c0_40], %58 {strides = array<i32>} : memref<1x32x256xf32, #tpu.memory_space<vmem>>, vector<1x32x256xf32>,
    return
  }
  func.func @transform_0(%arg0: i32) -> (i32, i32, i32) {
    %c0_i32 = arith.constant 0 : i32
    %c0_i32_0 = arith.constant 0 : i32
    %c0_i32_1 = arith.constant 0 : i32
    return %arg0, %c0_i32, %c0_i32_0 : i32, i32, i32
  }
  func.func @transform_1(%arg0: i32) -> (i32, i32, i32) {
    %c0_i32 = arith.constant 0 : i32
    %c0_i32_0 = arith.constant 0 : i32
    %c0_i32_1 = arith.constant 0 : i32
    %c0_i32_2 = arith.constant 0 : i32
    return %c0_i32, %c0_i32_0, %c0_i32_1 : i32, i32, i32
  }
  func.func @transform_2(%arg0: i32) -> (i32, i32) {
    %c0_i32 = arith.constant 0 : i32
    %c0_i32_0 = arith.constant 0 : i32
    %c0_i32_1 = arith.constant 0 : i32
    return %c0_i32, %c0_i32_0 : i32, i32
  }
  func.func @transform_3(%arg0: i32) -> (i32, i32, i32) {
    %c0_i32 = arith.constant 0 : i32
    %c0_i32_0 = arith.constant 0 : i32
    %c0_i32_1 = arith.constant 0 : i32
    %c0_i32_2 = arith.constant 0 : i32
    return %c0_i32, %c0_i32_0, %c0_i32_1 : i32, i32, i32
  }
  func.func @transform_4(%arg0: i32) -> (i32, i32) {
    %c0_i32 = arith.constant 0 : i32
    %c0_i32_0 = arith.constant 0 : i32
    %c0_i32_1 = arith.constant 0 : i32
    return %c0_i32, %c0_i32_0 : i32, i32
  }
  func.func @transform_5(%arg0: i32) -> (i32, i32, i32) {
    %c0_i32 = arith.constant 0 : i32
    %c0_i32_0 = arith.constant 0 : i32
    %c0_i32_1 = arith.constant 0 : i32
    return %arg0, %c0_i32, %c0_i32_0 : i32, i32, i32
  }
}

</mosaic_0001>

<llo_original>
// kernel: tile.18
$region0: #{tile.18}
  #allocation0 [shape = 's32[1]{0}', space=sflag, size = 0x4, scoped, tag = 'scoped memory for tile.18']
  %s0 = inlined_call_operand.vmem [shape: f32[8], index: 0, kind: input, shape index: {}]
  %s1 = inlined_call_operand.vmem [shape: f32[32,8], index: 1, kind: output, shape index: {}]
  // Predicated region
  $region2: #{tile.18} parent=0 // pred_check
    _
  $region3: #{tile.18} parent=0 // pred_check_branch
    %3 = sbr.rel (0) target = $region5
  $region4: #{tile.18} parent=0 // pred_region
    _
  $region5: #{tile.18} parent=0 // pred_fallthru
    _
  %v4 = vld [vmem:[%s0] ss:$0 sm:$0xff]
  %5 = vst [vmem:[%s1] sm:$0xff] %v4
  %s6 = scalar_lea.vmem %s1, 8
  %7 = vst [vmem:[%s6] sm:$0xff] %v4
  %s8 = scalar_lea.vmem %s1, 16
  %9 = vst [vmem:[%s8] sm:$0xff] %v4
  %s10 = scalar_lea.vmem %s1, 24
  %11 = vst [vmem:[%s10] sm:$0xff] %v4

// kernel: tile.19
$region0: #{tile.19}
  %s0 = inlined_call_operand.vmem [shape: f32[32,8], index: 0, kind: input, shape index: {}]
  %s1 = inlined_call_operand.vmem [shape: f32[1,256], index: 1, kind: output, shape index: {}]
  $region1: #{tile.19} parent=0
    #allocation0 [shape = 'u8[8192]{0}', space=vmem, size = 0x2000, scoped, tag = 'scoped mem for output reshape']
    %s2 = smov 3
    %v3 = vld [vmem:[%s0] ss:$16 sm:%s2]
    %vm4 = vcmask 64512
    %5 = vst.msk [vmem:[#allocation0] ss:$8 sm:$0x3] %vm4, %v3
    %s6 = scalar_lea.vmem %s0, 15
    %s7 = smov 3
    %v8 = vld [vmem:[%s6] ss:$16 sm:%s7]
    %9 = vrot.lane.b32.xlu0 %v8, 120
    %v10 = vpop.permute.xlu0 %9
    %vm11 = vcmask 1048512
    %12 = vst.msk [vmem:[#allocation0] ss:$8 sm:$0x3] %vm11, %v10
    %s13 = scalar_lea.vmem %s0, 14
    %s14 = smov 3
    %v15 = vld [vmem:[%s13] ss:$16 sm:%s14]
    %16 = vrot.lane.b32.xlu0 %v15, 112
    %v17 = vpop.permute.xlu0 %16
    %vm18 = vcmask 982912
    %19 = vst.msk [vmem:[#allocation0] ss:$8 sm:$0x3] %vm18, %v17
    %s20 = scalar_lea.vmem %s0, 13
    %s21 = smov 3
    %v22 = vld [vmem:[%s20] ss:$16 sm:%s21]
    %23 = vrot.lane.b32.xlu0 %v22, 104
    %v24 = vpop.permute.xlu0 %23
    %vm25 = vcmask 917312
    %26 = vst.msk [vmem:[#allocation0] ss:$8 sm:$0x3] %vm25, %v24
    %s27 = scalar_lea.vmem %s0, 12
    %s28 = smov 3
    %v29 = vld [vmem:[%s27] ss:$16 sm:%s28]
    %30 = vrot.lane.b32.xlu0 %v29, 96
    %v31 = vpop.permute.xlu0 %30
    %vm32 = vcmask 851712
    %33 = vst.msk [vmem:[#allocation0] ss:$8 sm:$0x3] %vm32, %v31
    %s34 = scalar_lea.vmem %s0, 11
    %s35 = smov 3
    %v36 = vld [vmem:[%s34] ss:$16 sm:%s35]
    %37 = vrot.lane.b32.xlu0 %v36, 88
    %v38 = vpop.permute.xlu0 %37
    %vm39 = vcmask 786112
    %40 = vst.msk [vmem:[#allocation0] ss:$8 sm:$0x3] %vm39, %v38
    %s41 = scalar_lea.vmem %s0, 10
    %s42 = smov 3
    %v43 = vld [vmem:[%s41] ss:$16 sm:%s42]
    %44 = vrot.lane.b32.xlu0 %v43, 80
    %v45 = vpop.permute.xlu0 %44
    %vm46 = vcmask 720512
    %47 = vst.msk [vmem:[#allocation0] ss:$8 sm:$0x3] %vm46, %v45
    %s48 = scalar_lea.vmem %s0, 9
    %s49 = smov 3
    %v50 = vld [vmem:[%s48] ss:$16 sm:%s49]
    %51 = vrot.lane.b32.xlu0 %v50, 72
    %v52 = vpop.permute.xlu0 %51
    %vm53 = vcmask 654912
    %54 = vst.msk [vmem:[#allocation0] ss:$8 sm:$0x3] %vm53, %v52
    %s55 = scalar_lea.vmem %s0, 8
    %s56 = smov 3
    %v57 = vld [vmem:[%s55] ss:$16 sm:%s56]
    %58 = vrot.lane.b32.xlu0 %v57, 64
    %v59 = vpop.permute.xlu0 %58
    %vm60 = vcmask 589312
    %61 = vst.msk [vmem:[#allocation0] ss:$8 sm:$0x3] %vm60, %v59
    %s62 = scalar_lea.vmem %s0, 7
    %s63 = smov 3
    %v64 = vld [vmem:[%s62] ss:$16 sm:%s63]
    %65 = vrot.lane.b32.xlu0 %v64, 56
    %v66 = vpop.permute.xlu0 %65
    %vm67 = vcmask 523712
    %68 = vst.msk [vmem:[#allocation0] ss:$8 sm:$0x3] %vm67, %v66
    %s69 = scalar_lea.vmem %s0, 6
    %s70 = smov 3
    %v71 = vld [vmem:[%s69] ss:$16 sm:%s70]
    %72 = vrot.lane.b32.xlu0 %v71, 48
    %v73 = vpop.permute.xlu0 %72
    %vm74 = vcmask 458112
    %75 = vst.msk [vmem:[#allocation0] ss:$8 sm:$0x3] %vm74, %v73
    %s76 = scalar_lea.vmem %s0, 5
    %s77 = smov 3
    %v78 = vld [vmem:[%s76] ss:$16 sm:%s77]
    %79 = vrot.lane.b32.xlu0 %v78, 40
    %v80 = vpop.permute.xlu0 %79
    %vm81 = vcmask 392512
    %82 = vst.msk [vmem:[#allocation0] ss:$8 sm:$0x3] %vm81, %v80
    %s83 = scalar_lea.vmem %s0, 4
    %s84 = smov 3
    %v85 = vld [vmem:[%s83] ss:$16 sm:%s84]
    %86 = vrot.lane.b32.xlu0 %v85, 32
    %v87 = vpop.permute.xlu0 %86
    %vm88 = vcmask 326912
    %89 = vst.msk [vmem:[#allocation0] ss:$8 sm:$0x3] %vm88, %v87
    %s90 = scalar_lea.vmem %s0, 3
    %s91 = smov 3
    %v92 = vld [vmem:[%s90] ss:$16 sm:%s91]
    %93 = vrot.lane.b32.xlu0 %v92, 24
    %v94 = vpop.permute.xlu0 %93
    %vm95 = vcmask 261312
    %96 = vst.msk [vmem:[#allocation0] ss:$8 sm:$0x3] %vm95, %v94
    %s97 = scalar_lea.vmem %s0, 2
    %s98 = smov 3
    %v99 = vld [vmem:[%s97] ss:$16 sm:%s98]
    %100 = vrot.lane.b32.xlu0 %v99, 16
    %v101 = vpop.permute.xlu0 %100
    %vm102 = vcmask 195712
    %103 = vst.msk [vmem:[#allocation0] ss:$8 sm:$0x3] %vm102, %v101
    %s104 = scalar_lea.vmem %s0, 1
    %s105 = smov 3
    %v106 = vld [vmem:[%s104] ss:$16 sm:%s105]
    %107 = vrot.lane.b32.xlu0 %v106, 8
    %v108 = vpop.permute.xlu0 %107
    %vm109 = vcmask 130112
    %110 = vst.msk [vmem:[#allocation0] ss:$8 sm:$0x3] %vm109, %v108
    %s112 = sshll.u32 1, 1
    %s113 = ssub.s32 %s112, 1
    %v115 = vld [vmem:[#allocation0] sm:%s113]
    %s116 = sshll.u32 1, 1
    %s117 = ssub.s32 %s116, 1
    %118 = vst [vmem:[%s1] sm:%s117] %v115
    %s119 = scalar_lea.vmem [#allocation0], 8
    %v120 = vld [vmem:[%s119] sm:%s113]
    %s121 = sshll.u32 1, 1
    %s122 = ssub.s32 %s121, 1
    %s123 = scalar_lea.vmem %s1, 1
    %124 = vst [vmem:[%s123] sm:%s122] %v120

// kernel: tile.13
$region0: #{tile.13}
  #allocation0 [shape = 's32[1]{0}', space=sflag, size = 0x4, scoped, tag = 'scoped memory for tile.13']
  %s0 = inlined_call_operand.vmem [shape: f32[4], index: 0, kind: input, shape index: {}]
  %s1 = inlined_call_operand.vmem [shape: f32[32,4], index: 1, kind: output, shape index: {}]
  // Predicated region
  $region2: #{tile.13} parent=0 // pred_check
    _
  $region3: #{tile.13} parent=0 // pred_check_branch
    %3 = sbr.rel (0) target = $region5
  $region4: #{tile.13} parent=0 // pred_region
    _
  $region5: #{tile.13} parent=0 // pred_fallthru
    _
  %v4 = vld [vmem:[%s0] ss:$0 sm:$0xff]
  %5 = vst [vmem:[%s1] sm:$0xff] %v4
  %s6 = scalar_lea.vmem %s1, 8
  %7 = vst [vmem:[%s6] sm:$0xff] %v4
  %s8 = scalar_lea.vmem %s1, 16
  %9 = vst [vmem:[%s8] sm:$0xff] %v4
  %s10 = scalar_lea.vmem %s1, 24
  %11 = vst [vmem:[%s10] sm:$0xff] %v4

// kernel: tile.14
$region0: #{tile.14}
  %s0 = inlined_call_operand.vmem [shape: f32[32,4], index: 0, kind: input, shape index: {}]
  %s1 = inlined_call_operand.vmem [shape: f32[1,128], index: 1, kind: output, shape index: {}]
  $region1: #{tile.14} parent=0
    #allocation0 [shape = 'u8[4096]{0}', space=vmem, size = 0x1000, scoped, tag = 'scoped mem for output reshape']
    %v2 = vld [vmem:[%s0] sm:$0x1]
    %vm3 = vcmask 31744
    %4 = vst.msk [vmem:[#allocation0] sm:$0x1] %vm3, %v2
    %s5 = scalar_lea.vmem %s0, 31
    %v6 = vld [vmem:[%s5] sm:$0x1]
    %7 = vrot.lane.b32.xlu0 %v6, 124
    %v8 = vpop.permute.xlu0 %7
    %vm9 = vcmask 1048544
    %10 = vst.msk [vmem:[#allocation0] sm:$0x1] %vm9, %v8
    %s11 = scalar_lea.vmem %s0, 30
    %v12 = vld [vmem:[%s11] sm:$0x1]
    %13 = vrot.lane.b32.xlu0 %v12, 120
    %v14 = vpop.permute.xlu0 %13
    %vm15 = vcmask 1015744
    %16 = vst.msk [vmem:[#allocation0] sm:$0x1] %vm15, %v14
    %s17 = scalar_lea.vmem %s0, 29
    %v18 = vld [vmem:[%s17] sm:$0x1]
    %19 = vrot.lane.b32.xlu0 %v18, 116
    %v20 = vpop.permute.xlu0 %19
    %vm21 = vcmask 982944
    %22 = vst.msk [vmem:[#allocation0] sm:$0x1] %vm21, %v20
    %s23 = scalar_lea.vmem %s0, 28
    %v24 = vld [vmem:[%s23] sm:$0x1]
    %25 = vrot.lane.b32.xlu0 %v24, 112
    %v26 = vpop.permute.xlu0 %25
    %vm27 = vcmask 950144
    %28 = vst.msk [vmem:[#allocation0] sm:$0x1] %vm27, %v26
    %s29 = scalar_lea.vmem %s0, 27
    %v30 = vld [vmem:[%s29] sm:$0x1]
    %31 = vrot.lane.b32.xlu0 %v30, 108
    %v32 = vpop.permute.xlu0 %31
    %vm33 = vcmask 917344
    %34 = vst.msk [vmem:[#allocation0] sm:$0x1] %vm33, %v32
    %s35 = scalar_lea.vmem %s0, 26
    %v36 = vld [vmem:[%s35] sm:$0x1]
    %37 = vrot.lane.b32.xlu0 %v36, 104
    %v38 = vpop.permute.xlu0 %37
    %vm39 = vcmask 884544
    %40 = vst.msk [vmem:[#allocation0] sm:$0x1] %vm39, %v38
    %s41 = scalar_lea.vmem %s0, 25
    %v42 = vld [vmem:[%s41] sm:$0x1]
    %43 = vrot.lane.b32.xlu0 %v42, 100
    %v44 = vpop.permute.xlu0 %43
    %vm45 = vcmask 851744
    %46 = vst.msk [vmem:[#allocation0] sm:$0x1] %vm45, %v44
    %s47 = scalar_lea.vmem %s0, 24
    %v48 = vld [vmem:[%s47] sm:$0x1]
    %49 = vrot.lane.b32.xlu0 %v48, 96
    %v50 = vpop.permute.xlu0 %49
    %vm51 = vcmask 818944
    %52 = vst.msk [vmem:[#allocation0] sm:$0x1] %vm51, %v50
    %s53 = scalar_lea.vmem %s0, 23
    %v54 = vld [vmem:[%s53] sm:$0x1]
    %55 = vrot.lane.b32.xlu0 %v54, 92
    %v56 = vpop.permute.xlu0 %55
    %vm57 = vcmask 786144
    %58 = vst.msk [vmem:[#allocation0] sm:$0x1] %vm57, %v56
    %s59 = scalar_lea.vmem %s0, 22
    %v60 = vld [vmem:[%s59] sm:$0x1]
    %61 = vrot.lane.b32.xlu0 %v60, 88
    %v62 = vpop.permute.xlu0 %61
    %vm63 = vcmask 753344
    %64 = vst.msk [vmem:[#allocation0] sm:$0x1] %vm63, %v62
    %s65 = scalar_lea.vmem %s0, 21
    %v66 = vld [vmem:[%s65] sm:$0x1]
    %67 = vrot.lane.b32.xlu0 %v66, 84
    %v68 = vpop.permute.xlu0 %67
    %vm69 = vcmask 720544
    %70 = vst.msk [vmem:[#allocation0] sm:$0x1] %vm69, %v68
    %s71 = scalar_lea.vmem %s0, 20
    %v72 = vld [vmem:[%s71] sm:$0x1]
    %73 = vrot.lane.b32.xlu0 %v72, 80
    %v74 = vpop.permute.xlu0 %73
    %vm75 = vcmask 687744
    %76 = vst.msk [vmem:[#allocation0] sm:$0x1] %vm75, %v74
    %s77 = scalar_lea.vmem %s0, 19
    %v78 = vld [vmem:[%s77] sm:$0x1]
    %79 = vrot.lane.b32.xlu0 %v78, 76
    %v80 = vpop.permute.xlu0 %79
    %vm81 = vcmask 654944
    %82 = vst.msk [vmem:[#allocation0] sm:$0x1] %vm81, %v80
    %s83 = scalar_lea.vmem %s0, 18
    %v84 = vld [vmem:[%s83] sm:$0x1]
    %85 = vrot.lane.b32.xlu0 %v84, 72
    %v86 = vpop.permute.xlu0 %85
    %vm87 = vcmask 622144
    %88 = vst.msk [vmem:[#allocation0] sm:$0x1] %vm87, %v86
    %s89 = scalar_lea.vmem %s0, 17
    %v90 = vld [vmem:[%s89] sm:$0x1]
    %91 = vrot.lane.b32.xlu0 %v90, 68
    %v92 = vpop.permute.xlu0 %91
    %vm93 = vcmask 589344
    %94 = vst.msk [vmem:[#allocation0] sm:$0x1] %vm93, %v92
    %s95 = scalar_lea.vmem %s0, 16
    %v96 = vld [vmem:[%s95] sm:$0x1]
    %97 = vrot.lane.b32.xlu0 %v96, 64
    %v98 = vpop.permute.xlu0 %97
    %vm99 = vcmask 556544
    %100 = vst.msk [vmem:[#allocation0] sm:$0x1] %vm99, %v98
    %s101 = scalar_lea.vmem %s0, 15
    %v102 = vld [vmem:[%s101] sm:$0x1]
    %103 = vrot.lane.b32.xlu0 %v102, 60
    %v104 = vpop.permute.xlu0 %103
    %vm105 = vcmask 523744
    %106 = vst.msk [vmem:[#allocation0] sm:$0x1] %vm105, %v104
    %s107 = scalar_lea.vmem %s0, 14
    %v108 = vld [vmem:[%s107] sm:$0x1]
    %109 = vrot.lane.b32.xlu0 %v108, 56
    %v110 = vpop.permute.xlu0 %109
    %vm111 = vcmask 490944
    %112 = vst.msk [vmem:[#allocation0] sm:$0x1] %vm111, %v110
    %s113 = scalar_lea.vmem %s0, 13
    %v114 = vld [vmem:[%s113] sm:$0x1]
    %115 = vrot.lane.b32.xlu0 %v114, 52
    %v116 = vpop.permute.xlu0 %115
    %vm117 = vcmask 458144
    %118 = vst.msk [vmem:[#allocation0] sm:$0x1] %vm117, %v116
    %s119 = scalar_lea.vmem %s0, 12
    %v120 = vld [vmem:[%s119] sm:$0x1]
    %121 = vrot.lane.b32.xlu0 %v120, 48
    %v122 = vpop.permute.xlu0 %121
    %vm123 = vcmask 425344
    %124 = vst.msk [vmem:[#allocation0] sm:$0x1] %vm123, %v122
    %s125 = scalar_lea.vmem %s0, 11
    %v126 = vld [vmem:[%s125] sm:$0x1]
    %127 = vrot.lane.b32.xlu0 %v126, 44
    %v128 = vpop.permute.xlu0 %127
    %vm129 = vcmask 392544
    %130 = vst.msk [vmem:[#allocation0] sm:$0x1] %vm129, %v128
    %s131 = scalar_lea.vmem %s0, 10
    %v132 = vld [vmem:[%s131] sm:$0x1]
    %133 = vrot.lane.b32.xlu0 %v132, 40
    %v134 = vpop.permute.xlu0 %133
    %vm135 = vcmask 359744
    %136 = vst.msk [vmem:[#allocation0] sm:$0x1] %vm135, %v134
    %s137 = scalar_lea.vmem %s0, 9
    %v138 = vld [vmem:[%s137] sm:$0x1]
    %139 = vrot.lane.b32.xlu0 %v138, 36
    %v140 = vpop.permute.xlu0 %139
    %vm141 = vcmask 326944
    %142 = vst.msk [vmem:[#allocation0] sm:$0x1] %vm141, %v140
    %s143 = scalar_lea.vmem %s0, 8
    %v144 = vld [vmem:[%s143] sm:$0x1]
    %145 = vrot.lane.b32.xlu0 %v144, 32
    %v146 = vpop.permute.xlu0 %145
    %vm147 = vcmask 294144
    %148 = vst.msk [vmem:[#allocation0] sm:$0x1] %vm147, %v146
    %s149 = scalar_lea.vmem %s0, 7
    %v150 = vld [vmem:[%s149] sm:$0x1]
    %151 = vrot.lane.b32.xlu0 %v150, 28
    %v152 = vpop.permute.xlu0 %151
    %vm153 = vcmask 261344
    %154 = vst.msk [vmem:[#allocation0] sm:$0x1] %vm153, %v152
    %s155 = scalar_lea.vmem %s0, 6
    %v156 = vld [vmem:[%s155] sm:$0x1]
    %157 = vrot.lane.b32.xlu0 %v156, 24
    %v158 = vpop.permute.xlu0 %157
    %vm159 = vcmask 228544
    %160 = vst.msk [vmem:[#allocation0] sm:$0x1] %vm159, %v158
    %s161 = scalar_lea.vmem %s0, 5
    %v162 = vld [vmem:[%s161] sm:$0x1]
    %163 = vrot.lane.b32.xlu0 %v162, 20
    %v164 = vpop.permute.xlu0 %163
    %vm165 = vcmask 195744
    %166 = vst.msk [vmem:[#allocation0] sm:$0x1] %vm165, %v164
    %s167 = scalar_lea.vmem %s0, 4
    %v168 = vld [vmem:[%s167] sm:$0x1]
    %169 = vrot.lane.b32.xlu0 %v168, 16
    %v170 = vpop.permute.xlu0 %169
    %vm171 = vcmask 162944
    %172 = vst.msk [vmem:[#allocation0] sm:$0x1] %vm171, %v170
    %s173 = scalar_lea.vmem %s0, 3
    %v174 = vld [vmem:[%s173] sm:$0x1]
    %175 = vrot.lane.b32.xlu0 %v174, 12
    %v176 = vpop.permute.xlu0 %175
    %vm177 = vcmask 130144
    %178 = vst.msk [vmem:[#allocation0] sm:$0x1] %vm177, %v176
    %s179 = scalar_lea.vmem %s0, 2
    %v180 = vld [vmem:[%s179] sm:$0x1]
    %181 = vrot.lane.b32.xlu0 %v180, 8
    %v182 = vpop.permute.xlu0 %181
    %vm183 = vcmask 97344
    %184 = vst.msk [vmem:[#allocation0] sm:$0x1] %vm183, %v182
    %s185 = scalar_lea.vmem %s0, 1
    %v186 = vld [vmem:[%s185] sm:$0x1]
    %187 = vrot.lane.b32.xlu0 %v186, 4
    %v188 = vpop.permute.xlu0 %187
    %vm189 = vcmask 64544
    %190 = vst.msk [vmem:[#allocation0] sm:$0x1] %vm189, %v188
    %s192 = sshll.u32 1, 1
    %s193 = ssub.s32 %s192, 1
    %v195 = vld [vmem:[#allocation0] sm:%s193]
    %s196 = sshll.u32 1, 1
    %s197 = ssub.s32 %s196, 1
    %198 = vst [vmem:[%s1] sm:%s197] %v195

// kernel: segnet_up2.1
$region0: #{segnet_up2.1}
  #allocation0 [shape = 'u32[]', space=smem, size = 0x4, offset = 0x4, fixed_abs, tag = 'smem constant byte address 0x4 - core index']
  #allocation1 [shape = 'u32[144,128]{1,0:T(1,128)}', space=vmem, size = 0x12000, scoped, tag = 'internal scratch']
  %s0 = inlined_call_operand.vmem [shape: f32[2,32,64], index: 0, kind: input, shape index: {}]
  %s1 = inlined_call_operand.vmem [shape: f32[3,64,128], index: 1, kind: input, shape index: {}]
  %s2 = inlined_call_operand.vmem [shape: f32[1,128], index: 2, kind: input, shape index: {}]
  %s3 = inlined_call_operand.vmem [shape: f32[3,128,256], index: 3, kind: input, shape index: {}]
  %s4 = inlined_call_operand.vmem [shape: f32[1,256], index: 4, kind: input, shape index: {}]
  %s5 = inlined_call_operand.vmem [shape: f32[2,32,256], index: 5, kind: output, shape index: {}]
  %s6 = sld [smem:[#allocation0]]
  $region53: #{segnet_up2.1} parent=0
    _
  %s8 = ssub.s32 1, %s6
  %s9 = scalar_select 0, %s8, %s6
  loop: start=0, step=1, limit=4
  $region2: #{segnet_up2.1} parent=0 // loop_pre_header
    _
  $region3: #{segnet_up2.1} parent=0 // loop_header
    %s11 = sphi 0, %s15
    %p12 = scmp.ge.s32.totalorder %s11, 4
    %s21 = sphi 0, %s23
    %s24 = sphi 0, %s21
    %s25 = sphi 0, %s24
    %s41 = sphi 0, %s25
    %s45 = sphi 0, %s45
    %s47 = sphi 0, %s45
    %s48 = sphi 0, %s47
    %s62 = sphi 0, %s48
    %s66 = sphi 0, %s66
    %s68 = sphi 0, %s66
    %s69 = sphi 0, %s68
    %s83 = sphi 0, %s69
    %s87 = sphi 0, %s87
    %s89 = sphi 0, %s87
    %s90 = sphi 0, %s89
    %s104 = sphi 0, %s90
    %s108 = sphi 0, %s108
    %s110 = sphi 0, %s108
    %s111 = sphi 0, %s110
    %s125 = sphi 0, %s111
    %s131 = sphi 0, %s133
    %s134 = sphi 0, %s131
    %s135 = sphi 0, %s134
    %s151 = sphi 0, %s135
  $region4: #{segnet_up2.1} parent=0 // loop_header_branch
    %14 = sbr.rel (%p12) target = $region8
  $region5: #{segnet_up2.1} parent=0 // loop_body
    %s16 = ssub.s32 %s11, 1
    %s17 = ssub.s32 %s11, 2
    %s18 = sadd.s32 %s11, 1
    %s19 = ssub.s32 %s11, %s18
    %p20 = scmp.eq.s32.totalorder %s19, 0
    %s22 = sadd.s32 %s21, 1
    %s23 = scalar_select %p20, %s21, %s22
    %p26 = pneg %p20
    %p27 = scmp.eq.s32.totalorder %s11, 1
    %p28 = por %p26, %p27
    %p29 = scmp.ne.s32.totalorder %s21, %s24
    %p30 = scmp.eq.s32.totalorder %s11, 0
    %p31 = por %p29, %p30
    %p32 = scmp.ne.s32.totalorder %s21, %s24
    %p33 = scmp.eq.s32.totalorder %s16, 1
    %p34 = por %p32, %p33
    %p35 = scmp.ne.s32.totalorder %s24, %s25
    %p36 = scmp.eq.s32.totalorder %s16, 0
    %p37 = por %p35, %p36
    %p38 = scmp.ne.s32.totalorder %s24, %s25
    %p39 = scmp.eq.s32.totalorder %s17, 1
    %p40 = por %p38, %p39
    %p42 = scmp.ne.s32.totalorder %s25, %s41
    %p43 = scmp.eq.s32.totalorder %s17, 0
    %p44 = por %p42, %p43
    %s46 = sadd.s32 %s45, 1
    %p49 = scmp.eq.s32.totalorder %s11, 1
    %p50 = scmp.ne.s32.totalorder %s45, %s47
    %p51 = scmp.eq.s32.totalorder %s11, 0
    %p52 = por %p50, %p51
    %p53 = scmp.ne.s32.totalorder %s45, %s47
    %p54 = scmp.eq.s32.totalorder %s16, 1
    %p55 = por %p53, %p54
    %p56 = scmp.ne.s32.totalorder %s47, %s48
    %p57 = scmp.eq.s32.totalorder %s16, 0
    %p58 = por %p56, %p57
    %p59 = scmp.ne.s32.totalorder %s47, %s48
    %p60 = scmp.eq.s32.totalorder %s17, 1
    %p61 = por %p59, %p60
    %p63 = scmp.ne.s32.totalorder %s48, %s62
    %p64 = scmp.eq.s32.totalorder %s17, 0
    %p65 = por %p63, %p64
    %s67 = sadd.s32 %s66, 1
    %p70 = scmp.eq.s32.totalorder %s11, 1
    %p71 = scmp.ne.s32.totalorder %s66, %s68
    %p72 = scmp.eq.s32.totalorder %s11, 0
    %p73 = por %p71, %p72
    %p74 = scmp.ne.s32.totalorder %s66, %s68
    %p75 = scmp.eq.s32.totalorder %s16, 1
    %p76 = por %p74, %p75
    %p77 = scmp.ne.s32.totalorder %s68, %s69
    %p78 = scmp.eq.s32.totalorder %s16, 0
    %p79 = por %p77, %p78
    %p80 = scmp.ne.s32.totalorder %s68, %s69
    %p81 = scmp.eq.s32.totalorder %s17, 1
    %p82 = por %p80, %p81
    %p84 = scmp.ne.s32.totalorder %s69, %s83
    %p85 = scmp.eq.s32.totalorder %s17, 0
    %p86 = por %p84, %p85
    %s88 = sadd.s32 %s87, 1
    %p91 = scmp.eq.s32.totalorder %s11, 1
    %p92 = scmp.ne.s32.totalorder %s87, %s89
    %p93 = scmp.eq.s32.totalorder %s11, 0
    %p94 = por %p92, %p93
    %p95 = scmp.ne.s32.totalorder %s87, %s89
    %p96 = scmp.eq.s32.totalorder %s16, 1
    %p97 = por %p95, %p96
    %p98 = scmp.ne.s32.totalorder %s89, %s90
    %p99 = scmp.eq.s32.totalorder %s16, 0
    %p100 = por %p98, %p99
    %p101 = scmp.ne.s32.totalorder %s89, %s90
    %p102 = scmp.eq.s32.totalorder %s17, 1
    %p103 = por %p101, %p102
    %p105 = scmp.ne.s32.totalorder %s90, %s104
    %p106 = scmp.eq.s32.totalorder %s17, 0
    %p107 = por %p105, %p106
    %s109 = sadd.s32 %s108, 1
    %p112 = scmp.eq.s32.totalorder %s11, 1
    %p113 = scmp.ne.s32.totalorder %s108, %s110
    %p114 = scmp.eq.s32.totalorder %s11, 0
    %p115 = por %p113, %p114
    %p116 = scmp.ne.s32.totalorder %s108, %s110
    %p117 = scmp.eq.s32.totalorder %s16, 1
    %p118 = por %p116, %p117
    %p119 = scmp.ne.s32.totalorder %s110, %s111
    %p120 = scmp.eq.s32.totalorder %s16, 0
    %p121 = por %p119, %p120
    %p122 = scmp.ne.s32.totalorder %s110, %s111
    %p123 = scmp.eq.s32.totalorder %s17, 1
    %p124 = por %p122, %p123
    %p126 = scmp.ne.s32.totalorder %s111, %s125
    %p127 = scmp.eq.s32.totalorder %s17, 0
    %p128 = por %p126, %p127
    %s129 = ssub.s32 %s11, %s18
    %p130 = scmp.eq.s32.totalorder %s129, 0
    %s132 = sadd.s32 %s131, 1
    %s133 = scalar_select %p130, %s131, %s132
    %p136 = pneg %p130
    %p137 = scmp.eq.s32.totalorder %s11, 1
    %p138 = por %p136, %p137
    %p139 = scmp.ne.s32.totalorder %s131, %s134
    %p140 = scmp.eq.s32.totalorder %s11, 0
    %p141 = por %p139, %p140
    %p142 = scmp.ne.s32.totalorder %s131, %s134
    %p143 = scmp.eq.s32.totalorder %s16, 1
    %p144 = por %p142, %p143
    %p145 = scmp.ne.s32.totalorder %s134, %s135
    %p146 = scmp.eq.s32.totalorder %s16, 0
    %p147 = por %p145, %p146
    %p148 = scmp.ne.s32.totalorder %s134, %s135
    %p149 = scmp.eq.s32.totalorder %s17, 1
    %p150 = por %p148, %p149
    %p152 = scmp.ne.s32.totalorder %s135, %s151
    %p153 = scmp.eq.s32.totalorder %s17, 0
    %p154 = por %p152, %p153
    %p155 = scmp.le.s32.totalorder 1, %s11
    %p156 = scmp.lt.s32.totalorder %s11, 3
    %p157 = pnand %p155, %p156
    %p158 = pneg %p157
    // Predicated region
    $region9: #{segnet_up2.1} parent=5 // pred_check
      _
    $region10: #{segnet_up2.1} parent=5 // pred_check_branch
      %160 = sbr.rel (%p157) target = $region12
    $region11: #{segnet_up2.1} parent=5 // pred_region
      %s161 = ssub.s32 %s11, 1
      // Predicated region
      $region13: #{segnet_up2.1} parent=11 // pred_check
        %p162 = pneg %p58
      $region14: #{segnet_up2.1} parent=11 // pred_check_branch
        %164 = sbr.rel (%p162) target = $region16
      $region15: #{segnet_up2.1} parent=11 // pred_region
        _
      $region16: #{segnet_up2.1} parent=11 // pred_fallthru
        _
      // Predicated region
      $region17: #{segnet_up2.1} parent=11 // pred_check
        %p165 = pneg %p79
      $region18: #{segnet_up2.1} parent=11 // pred_check_branch
        %167 = sbr.rel (%p165) target = $region20
      $region19: #{segnet_up2.1} parent=11 // pred_region
        _
      $region20: #{segnet_up2.1} parent=11 // pred_fallthru
        _
      // Predicated region
      $region21: #{segnet_up2.1} parent=11 // pred_check
        %p168 = pneg %p100
      $region22: #{segnet_up2.1} parent=11 // pred_check_branch
        %170 = sbr.rel (%p168) target = $region24
      $region23: #{segnet_up2.1} parent=11 // pred_region
        _
      $region24: #{segnet_up2.1} parent=11 // pred_fallthru
        _
      // Predicated region
      $region25: #{segnet_up2.1} parent=11 // pred_check
        %p171 = pneg %p121
      $region26: #{segnet_up2.1} parent=11 // pred_check_branch
        %173 = sbr.rel (%p171) target = $region28
      $region27: #{segnet_up2.1} parent=11 // pred_region
        _
      $region28: #{segnet_up2.1} parent=11 // pred_fallthru
        _
    $region12: #{segnet_up2.1} parent=5 // pred_fallthru
      _
    %p174 = scmp.lt.s32.totalorder %s11, 2
    // Predicated region
    $region29: #{segnet_up2.1} parent=5 // pred_check
      %p175 = pneg %p174
    $region30: #{segnet_up2.1} parent=5 // pred_check_branch
      %177 = sbr.rel (%p175) target = $region32
    $region31: #{segnet_up2.1} parent=5 // pred_region
      // Predicated region
      $region33: #{segnet_up2.1} parent=31 // pred_check
        %p178 = pneg %p31
      $region34: #{segnet_up2.1} parent=31 // pred_check_branch
        %180 = sbr.rel (%p178) target = $region36
      $region35: #{segnet_up2.1} parent=31 // pred_region
        %p181 = scmp.lt.s32.totalorder %s11, 1
        %s182 = scalar_select %p181, %s11, 1
        %s183 = smul.addr %s182, 4
        %s184 = smul.addr %s183, 8
        %s185 = scalar_lea.vmem %s0, %s184
      $region36: #{segnet_up2.1} parent=31 // pred_fallthru
        _
    $region32: #{segnet_up2.1} parent=5 // pred_fallthru
      _
    %p186 = scmp.le.s32.totalorder 1, %s11
    %p187 = scmp.lt.s32.totalorder %s11, 3
    %p188 = pnand %p186, %p187
    %p189 = pneg %p188
    // Predicated region
    $region37: #{segnet_up2.1} parent=5 // pred_check
      _
    $region38: #{segnet_up2.1} parent=5 // pred_check_branch
      %191 = sbr.rel (%p188) target = $region40
    $region39: #{segnet_up2.1} parent=5 // pred_region
      %s192 = ssub.s32 %s11, 1
      %p193 = scmp.lt.s32.totalorder %s16, 1
      %s194 = scalar_select %p193, %s16, 1
      %s195 = smul.addr %s194, 4
      %s196 = smul.addr %s195, 8
      %s197 = scalar_lea.vmem %s0, %s196
      %p198 = pneg %p37
      %p199 = pneg %p34
      %p200 = pneg %p58
      %p201 = pneg %p55
      %p202 = pneg %p79
      %p203 = pneg %p76
      %p204 = pneg %p100
      %p205 = pneg %p97
      %p206 = pneg %p121
      %p207 = pneg %p118
      %p208 = pneg %p147
      %p209 = pneg %p144
      %p210 = scmp.lt.s32.totalorder %s16, 1
      %s211 = scalar_select %p210, %s16, 1
      %s212 = smul.addr %s211, 8
      %s213 = smul.addr %s212, 8
      %s214 = scalar_lea.vmem %s5, %s213
      %p215 = scmp.lt.s32.totalorder %s16, 1
      %s216 = scalar_select %p215, %s16, 1
      %s217 = smul.addr %s216, 4
      %s218 = smul.addr %s217, 8
      %s219 = scalar_lea.vmem %s0, %s218
      %p220 = scmp.lt.s32.totalorder %s16, 1
      %s221 = scalar_select %p220, %s16, 1
      %s222 = smul.addr %s221, 8
      %s223 = smul.addr %s222, 8
      %s224 = scalar_lea.vmem %s5, %s223
      %v225 = vld [vmem:[%s219] sm:$0xff]
      %v226 = vld [vmem:[%s219 + $0x8] sm:$0xff]
      %v227 = vld [vmem:[%s219 + $0x10] sm:$0xff]
      %v228 = vld [vmem:[%s219 + $0x18] sm:$0xff]
      %v229 = vlaneseq
      %v230 = vshrl.u32 %v229, 7
      %v231 = vadd.s32 %v230, 8
      %v232 = vadd.s32 %v230, 16
      %v233 = vadd.s32 %v230, 24
      %vm234 = vcmp.eq.s32.totalorder %v230, 0
      %vm235 = vcmp.eq.s32.totalorder %v231, 0
      %vm236 = vcmp.eq.s32.totalorder %v232, 0
      %vm237 = vcmp.eq.s32.totalorder %v233, 0
      %v238 = vrot.slane %v225, 7
      %v239 = vrot.slane %v226, 7
      %v240 = vrot.slane %v227, 7
      %v241 = vrot.slane %v228, 7
      %vm242 = vcmp.lt.s32.totalorder %v230, 1
      %v243 = vsel %vm242, %v240, %v241
      %v244 = vsel %vm242, %v239, %v240
      %v245 = vsel %vm242, %v238, %v239
      %v246 = vsel %vm242, %v241, %v238
      %v247 = vsel %vm234, 0.0, %v246
      %v248 = vsel %vm235, 0.0, %v245
      %v249 = vsel %vm236, 0.0, %v244
      %v250 = vsel %vm237, 0.0, %v243
      %vm251 = vcmp.eq.s32.totalorder %v230, 31
      %vm252 = vcmp.eq.s32.totalorder %v231, 31
      %vm253 = vcmp.eq.s32.totalorder %v232, 31
      %vm254 = vcmp.eq.s32.totalorder %v233, 31
      %v255 = vrot.slane %v225, 1
      %v256 = vrot.slane %v226, 1
      %v257 = vrot.slane %v227, 1
      %v258 = vrot.slane %v228, 1
      %vm259 = vcmp.lt.s32.totalorder %v230, 7
      %v260 = vsel %vm259, %v257, %v258
      %v261 = vsel %vm259, %v256, %v257
      %v262 = vsel %vm259, %v255, %v256
      %v263 = vsel %vm259, %v258, %v255
      %v264 = vsel %vm251, 0.0, %v262
      %v265 = vsel %vm252, 0.0, %v261
      %v266 = vsel %vm253, 0.0, %v260
      %v267 = vsel %vm254, 0.0, %v263
      %v268 = vld [vmem:[%s1] sm:$0xff]
      %v269 = vld [vmem:[%s1 + $0x8] sm:$0xff]
      %v270 = vld [vmem:[%s1 + $0x10] sm:$0xff]
      %v271 = vld [vmem:[%s1 + $0x18] sm:$0xff]
      %v272 = vld [vmem:[%s1 + $0x20] sm:$0xff]
      %v273 = vld [vmem:[%s1 + $0x28] sm:$0xff]
      %v274 = vld [vmem:[%s1 + $0x30] sm:$0xff]
      %v275 = vld [vmem:[%s1 + $0x38] sm:$0xff]
      %s276 = scalar_lea.vmem %s1, 64
      %v277 = vld [vmem:[%s276] sm:$0xff]
      %v278 = vld [vmem:[%s276 + $0x8] sm:$0xff]
      %v279 = vld [vmem:[%s276 + $0x10] sm:$0xff]
      %v280 = vld [vmem:[%s276 + $0x18] sm:$0xff]
      %v281 = vld [vmem:[%s276 + $0x20] sm:$0xff]
      %v282 = vld [vmem:[%s276 + $0x28] sm:$0xff]
      %v283 = vld [vmem:[%s276 + $0x30] sm:$0xff]
      %v284 = vld [vmem:[%s276 + $0x38] sm:$0xff]
      %vm285 = vcmask 523264
      %v287 = vsel %vm285, %v225, 0
      %v290 = vsel %vm285, %v226, 0
      %v293 = vsel %vm285, %v227, 0
      %v296 = vsel %vm285, %v228, 0
      %298 = vmatprep.subr.mxu0 0.0
      %299 = vmatpush1.msra.mxu0 0.0
      %300 = vmatprep.subr.mxu0 0.0
      %301 = vmatpush1.msra.mxu0 0.0
      %302 = vmatprep.subr.mxu0 0.0
      %303 = vmatpush1.msra.mxu0 0.0
      %304 = vmatprep.subr.mxu0 0.0
      %305 = vmatpush1.msra.mxu0 0.0
      %306 = vmatprep.subr.mxu0 0.0
      %307 = vmatpush1.msra.mxu0 0.0
      %308 = vmatprep.subr.mxu0 0.0
      %309 = vmatpush1.msra.mxu0 0.0
      %310 = vmatprep.subr.mxu0 0.0
      %311 = vmatpush1.msra.mxu0 0.0
      %312 = vmatprep.subr.mxu0 0.0
      %313 = vmatpush1.msra.mxu0 0.0
      %314 = vmatprep.subr.mxu0 0.0
      %315 = vmatpush1.msra.mxu0 %v284
      %316 = vmatprep.subr.mxu0 0.0
      %317 = vmatpush1.msra.mxu0 %v283
      %318 = vmatprep.subr.mxu0 0.0
      %319 = vmatpush1.msra.mxu0 %v282
      %320 = vmatprep.subr.mxu0 0.0
      %321 = vmatpush1.msra.mxu0 %v281
      %322 = vmatprep.subr.mxu0 0.0
      %323 = vmatpush1.msra.mxu0 %v280
      %324 = vmatprep.subr.mxu0 0.0
      %325 = vmatpush1.msra.mxu0 %v279
      %326 = vmatprep.subr.mxu0 0.0
      %327 = vmatpush1.msra.mxu0 %v278
      %328 = vmatprep.subr.mxu0 0.0
      %329 = vmatpush1.msra.mxu0 %v277
      %330 = vmatprep.subr.mxu0 0.0
      %331 = vmatpush2.msra.mxu0 0.0
      %332 = vmatprep.subr.mxu0 0.0
      %333 = vmatpush2.msra.mxu0 0.0
      %334 = vmatprep.subr.mxu0 0.0
      %335 = vmatpush2.msra.mxu0 0.0
      %336 = vmatprep.subr.mxu0 0.0
      %337 = vmatpush2.msra.mxu0 0.0
      %338 = vmatprep.subr.mxu0 0.0
      %339 = vmatpush2.msra.mxu0 0.0
      %340 = vmatprep.subr.mxu0 0.0
      %341 = vmatpush2.msra.mxu0 0.0
      %342 = vmatprep.subr.mxu0 0.0
      %343 = vmatpush2.msra.mxu0 0.0
      %344 = vmatprep.subr.mxu0 0.0
      %345 = vmatpush2.msra.mxu0 0.0
      %346 = vmatprep.subr.mxu0 0.0
      %347 = vmatpush2.msra.mxu0 0.0
      %348 = vmatprep.subr.mxu0 0.0
      %349 = vmatpush2.msra.mxu0 0.0
      %350 = vmatprep.subr.mxu0 0.0
      %351 = vmatpush2.msra.mxu0 0.0
      %352 = vmatprep.subr.mxu0 0.0
      %353 = vmatpush2.msra.mxu0 0.0
      %354 = vmatprep.subr.mxu0 0.0
      %355 = vmatpush2.msra.mxu0 0.0
      %356 = vmatprep.subr.mxu0 0.0
      %357 = vmatpush2.msra.mxu0 0.0
      %358 = vmatprep.subr.mxu0 0.0
      %359 = vmatpush2.msra.mxu0 0.0
      %360 = vmatprep.subr.mxu0 0.0
      %361 = vmatpush2.msra.mxu0 0.0
      %362 = vmatprep.mubr.f32.mxu0 0.0
      %363 = vmatmul.mubr.f32.gmra.mxu0 %v287
      %v364 = vpop.f32.mrf.mxu0
      %v365 = vadd.f32 0.0, %v364
      %v366 = vpop.f32.mrf.mxu0
      %367 = vmatprep.mubr.f32.mxu0 0.0
      %368 = vmatmul.mubr.f32.gmra.mxu0 %v290
      %v369 = vpop.f32.mrf.mxu0
      %v370 = vadd.f32 0.0, %v369
      %v371 = vpop.f32.mrf.mxu0
      %372 = vmatprep.mubr.f32.mxu0 0.0
      %373 = vmatmul.mubr.f32.gmra.mxu0 %v293
      %v374 = vpop.f32.mrf.mxu0
      %v375 = vadd.f32 0.0, %v374
      %v376 = vpop.f32.mrf.mxu0
      %377 = vmatprep.mubr.f32.mxu0 0.0
      %378 = vmatmul.mubr.f32.gmra.mxu0 %v296
      %v379 = vpop.f32.mrf.mxu0
      %v380 = vadd.f32 0.0, %v379
      %v381 = vpop.f32.mrf.mxu0
      %382 = vdwg.mxu0
      %v384 = vsel %vm285, %v247, 0
      %v387 = vsel %vm285, %v248, 0
      %v390 = vsel %vm285, %v249, 0
      %v393 = vsel %vm285, %v250, 0
      %395 = vmatprep.subr.mxu0 0.0
      %396 = vmatpush1.msra.mxu0 0.0
      %397 = vmatprep.subr.mxu0 0.0
      %398 = vmatpush1.msra.mxu0 0.0
      %399 = vmatprep.subr.mxu0 0.0
      %400 = vmatpush1.msra.mxu0 0.0
      %401 = vmatprep.subr.mxu0 0.0
      %402 = vmatpush1.msra.mxu0 0.0
      %403 = vmatprep.subr.mxu0 0.0
      %404 = vmatpush1.msra.mxu0 0.0
      %405 = vmatprep.subr.mxu0 0.0
      %406 = vmatpush1.msra.mxu0 0.0
      %407 = vmatprep.subr.mxu0 0.0
      %408 = vmatpush1.msra.mxu0 0.0
      %409 = vmatprep.subr.mxu0 0.0
      %410 = vmatpush1.msra.mxu0 0.0
      %411 = vmatprep.subr.mxu0 0.0
      %412 = vmatpush1.msra.mxu0 %v275
      %413 = vmatprep.subr.mxu0 0.0
      %414 = vmatpush1.msra.mxu0 %v274
      %415 = vmatprep.subr.mxu0 0.0
      %416 = vmatpush1.msra.mxu0 %v273
      %417 = vmatprep.subr.mxu0 0.0
      %418 = vmatpush1.msra.mxu0 %v272
      %419 = vmatprep.subr.mxu0 0.0
      %420 = vmatpush1.msra.mxu0 %v271
      %421 = vmatprep.subr.mxu0 0.0
      %422 = vmatpush1.msra.mxu0 %v270
      %423 = vmatprep.subr.mxu0 0.0
      %424 = vmatpush1.msra.mxu0 %v269
      %425 = vmatprep.subr.mxu0 0.0
      %426 = vmatpush1.msra.mxu0 %v268
      %427 = vmatprep.subr.mxu0 0.0
      %428 = vmatpush2.msra.mxu0 0.0
      %429 = vmatprep.subr.mxu0 0.0
      %430 = vmatpush2.msra.mxu0 0.0
      %431 = vmatprep.subr.mxu0 0.0
      %432 = vmatpush2.msra.mxu0 0.0
      %433 = vmatprep.subr.mxu0 0.0
      %434 = vmatpush2.msra.mxu0 0.0
      %435 = vmatprep.subr.mxu0 0.0
      %436 = vmatpush2.msra.mxu0 0.0
      %437 = vmatprep.subr.mxu0 0.0
      %438 = vmatpush2.msra.mxu0 0.0
      %439 = vmatprep.subr.mxu0 0.0
      %440 = vmatpush2.msra.mxu0 0.0
      %441 = vmatprep.subr.mxu0 0.0
      %442 = vmatpush2.msra.mxu0 0.0
      %443 = vmatprep.subr.mxu0 0.0
      %444 = vmatpush2.msra.mxu0 0.0
      %445 = vmatprep.subr.mxu0 0.0
      %446 = vmatpush2.msra.mxu0 0.0
      %447 = vmatprep.subr.mxu0 0.0
      %448 = vmatpush2.msra.mxu0 0.0
      %449 = vmatprep.subr.mxu0 0.0
      %450 = vmatpush2.msra.mxu0 0.0
      %451 = vmatprep.subr.mxu0 0.0
      %452 = vmatpush2.msra.mxu0 0.0
      %453 = vmatprep.subr.mxu0 0.0
      %454 = vmatpush2.msra.mxu0 0.0
      %455 = vmatprep.subr.mxu0 0.0
      %456 = vmatpush2.msra.mxu0 0.0
      %457 = vmatprep.subr.mxu0 0.0
      %458 = vmatpush2.msra.mxu0 0.0
      %459 = vmatprep.mubr.f32.mxu0 0.0
      %460 = vmatmul.mubr.f32.gmra.mxu0 %v384
      %v461 = vpop.f32.mrf.mxu0
      %v462 = vadd.f32 %v365, %v461
      %v463 = vpop.f32.mrf.mxu0
      %464 = vmatprep.mubr.f32.mxu0 0.0
      %465 = vmatmul.mubr.f32.gmra.mxu0 %v387
      %v466 = vpop.f32.mrf.mxu0
      %v467 = vadd.f32 %v370, %v466
      %v468 = vpop.f32.mrf.mxu0
      %469 = vmatprep.mubr.f32.mxu0 0.0
      %470 = vmatmul.mubr.f32.gmra.mxu0 %v390
      %v471 = vpop.f32.mrf.mxu0
      %v472 = vadd.f32 %v375, %v471
      %v473 = vpop.f32.mrf.mxu0
      %474 = vmatprep.mubr.f32.mxu0 0.0
      %475 = vmatmul.mubr.f32.gmra.mxu0 %v393
      %v476 = vpop.f32.mrf.mxu0
      %v477 = vadd.f32 %v380, %v476
      %v478 = vpop.f32.mrf.mxu0
      %479 = vdwg.mxu0
      %s480 = scalar_lea.vmem %s1, 128
      %v481 = vld [vmem:[%s480] sm:$0xff]
      %v482 = vld [vmem:[%s480 + $0x8] sm:$0xff]
      %v483 = vld [vmem:[%s480 + $0x10] sm:$0xff]
      %v484 = vld [vmem:[%s480 + $0x18] sm:$0xff]
      %v485 = vld [vmem:[%s480 + $0x20] sm:$0xff]
      %v486 = vld [vmem:[%s480 + $0x28] sm:$0xff]
      %v487 = vld [vmem:[%s480 + $0x30] sm:$0xff]
      %v488 = vld [vmem:[%s480 + $0x38] sm:$0xff]
      %v490 = vsel %vm285, %v264, 0
      %v493 = vsel %vm285, %v265, 0
      %v496 = vsel %vm285, %v266, 0
      %v499 = vsel %vm285, %v267, 0
      %501 = vmatprep.subr.mxu0 0.0
      %502 = vmatpush1.msra.mxu0 0.0
      %503 = vmatprep.subr.mxu0 0.0
      %504 = vmatpush1.msra.mxu0 0.0
      %505 = vmatprep.subr.mxu0 0.0
      %506 = vmatpush1.msra.mxu0 0.0
      %507 = vmatprep.subr.mxu0 0.0
      %508 = vmatpush1.msra.mxu0 0.0
      %509 = vmatprep.subr.mxu0 0.0
      %510 = vmatpush1.msra.mxu0 0.0
      %511 = vmatprep.subr.mxu0 0.0
      %512 = vmatpush1.msra.mxu0 0.0
      %513 = vmatprep.subr.mxu0 0.0
      %514 = vmatpush1.msra.mxu0 0.0
      %515 = vmatprep.subr.mxu0 0.0
      %516 = vmatpush1.msra.mxu0 0.0
      %517 = vmatprep.subr.mxu0 0.0
      %518 = vmatpush1.msra.mxu0 %v488
      %519 = vmatprep.subr.mxu0 0.0
      %520 = vmatpush1.msra.mxu0 %v487
      %521 = vmatprep.subr.mxu0 0.0
      %522 = vmatpush1.msra.mxu0 %v486
      %523 = vmatprep.subr.mxu0 0.0
      %524 = vmatpush1.msra.mxu0 %v485
      %525 = vmatprep.subr.mxu0 0.0
      %526 = vmatpush1.msra.mxu0 %v484
      %527 = vmatprep.subr.mxu0 0.0
      %528 = vmatpush1.msra.mxu0 %v483
      %529 = vmatprep.subr.mxu0 0.0
      %530 = vmatpush1.msra.mxu0 %v482
      %531 = vmatprep.subr.mxu0 0.0
      %532 = vmatpush1.msra.mxu0 %v481
      %533 = vmatprep.subr.mxu0 0.0
      %534 = vmatpush2.msra.mxu0 0.0
      %535 = vmatprep.subr.mxu0 0.0
      %536 = vmatpush2.msra.mxu0 0.0
      %537 = vmatprep.subr.mxu0 0.0
      %538 = vmatpush2.msra.mxu0 0.0
      %539 = vmatprep.subr.mxu0 0.0
      %540 = vmatpush2.msra.mxu0 0.0
      %541 = vmatprep.subr.mxu0 0.0
      %542 = vmatpush2.msra.mxu0 0.0
      %543 = vmatprep.subr.mxu0 0.0
      %544 = vmatpush2.msra.mxu0 0.0
      %545 = vmatprep.subr.mxu0 0.0
      %546 = vmatpush2.msra.mxu0 0.0
      %547 = vmatprep.subr.mxu0 0.0
      %548 = vmatpush2.msra.mxu0 0.0
      %549 = vmatprep.subr.mxu0 0.0
      %550 = vmatpush2.msra.mxu0 0.0
      %551 = vmatprep.subr.mxu0 0.0
      %552 = vmatpush2.msra.mxu0 0.0
      %553 = vmatprep.subr.mxu0 0.0
      %554 = vmatpush2.msra.mxu0 0.0
      %555 = vmatprep.subr.mxu0 0.0
      %556 = vmatpush2.msra.mxu0 0.0
      %557 = vmatprep.subr.mxu0 0.0
      %558 = vmatpush2.msra.mxu0 0.0
      %559 = vmatprep.subr.mxu0 0.0
      %560 = vmatpush2.msra.mxu0 0.0
      %561 = vmatprep.subr.mxu0 0.0
      %562 = vmatpush2.msra.mxu0 0.0
      %563 = vmatprep.subr.mxu0 0.0
      %564 = vmatpush2.msra.mxu0 0.0
      %565 = vmatprep.mubr.f32.mxu0 0.0
      %566 = vmatmul.mubr.f32.gmra.mxu0 %v490
      %v567 = vpop.f32.mrf.mxu0
      %v568 = vadd.f32 0.0, %v567
      %v569 = vpop.f32.mrf.mxu0
      %570 = vmatprep.mubr.f32.mxu0 0.0
      %571 = vmatmul.mubr.f32.gmra.mxu0 %v493
      %v572 = vpop.f32.mrf.mxu0
      %v573 = vadd.f32 0.0, %v572
      %v574 = vpop.f32.mrf.mxu0
      %575 = vmatprep.mubr.f32.mxu0 0.0
      %576 = vmatmul.mubr.f32.gmra.mxu0 %v496
      %v577 = vpop.f32.mrf.mxu0
      %v578 = vadd.f32 0.0, %v577
      %v579 = vpop.f32.mrf.mxu0
      %580 = vmatprep.mubr.f32.mxu0 0.0
      %581 = vmatmul.mubr.f32.gmra.mxu0 %v499
      %v582 = vpop.f32.mrf.mxu0
      %v583 = vadd.f32 0.0, %v582
      %v584 = vpop.f32.mrf.mxu0
      %585 = vdwg.mxu0
      %v586 = vadd.f32 %v462, %v568
      %v587 = vadd.f32 %v467, %v573
      %v588 = vadd.f32 %v472, %v578
      %v589 = vadd.f32 %v477, %v583
      %v590 = vld [vmem:[%s2] sm:$0x1]
      %v592 = vlaneseq
      %v593 = vshrl.u32 %v592, 7
      %v594 = vsub.s32 0, %v593
      %v595 = vrot.slane %v590, %v594
      %v597 = vadd.f32 %v586, %v595
      %v598 = vadd.f32 %v587, %v595
      %v599 = vadd.f32 %v588, %v595
      %v600 = vadd.f32 %v589, %v595
      %v601 = vmax.f32 %v597, 0.0
      %v602 = vmax.f32 %v598, 0.0
      %v603 = vmax.f32 %v599, 0.0
      %v604 = vmax.f32 %v600, 0.0
      %v605 = vrot.slane %v601, 7
      %v606 = vrot.slane %v602, 7
      %v607 = vrot.slane %v603, 7
      %v608 = vrot.slane %v604, 7
      %v609 = vsel %vm242, %v607, %v608
      %v610 = vsel %vm242, %v606, %v607
      %v611 = vsel %vm242, %v605, %v606
      %v612 = vsel %vm242, %v608, %v605
      %v613 = vsel %vm234, 0.0, %v612
      %v614 = vsel %vm235, 0.0, %v611
      %v615 = vsel %vm236, 0.0, %v610
      %v616 = vsel %vm237, 0.0, %v609
      %v617 = vrot.slane %v601, 1
      %v618 = vrot.slane %v602, 1
      %v619 = vrot.slane %v603, 1
      %v620 = vrot.slane %v604, 1
      %v621 = vsel %vm259, %v619, %v620
      %v622 = vsel %vm259, %v618, %v619
      %v623 = vsel %vm259, %v617, %v618
      %v624 = vsel %vm259, %v620, %v617
      %v625 = vsel %vm251, 0.0, %v623
      %v626 = vsel %vm252, 0.0, %v622
      %v627 = vsel %vm253, 0.0, %v621
      %v628 = vsel %vm254, 0.0, %v624
      %v629 = vld [vmem:[%s3] sm:$0xff]
      %v630 = vld [vmem:[%s3 + $0x8] sm:$0xff]
      %v631 = vld [vmem:[%s3 + $0x10] sm:$0xff]
      %v632 = vld [vmem:[%s3 + $0x18] sm:$0xff]
      %v633 = vld [vmem:[%s3 + $0x20] sm:$0xff]
      %v634 = vld [vmem:[%s3 + $0x28] sm:$0xff]
      %v635 = vld [vmem:[%s3 + $0x30] sm:$0xff]
      %v636 = vld [vmem:[%s3 + $0x38] sm:$0xff]
      %v637 = vld [vmem:[%s3 + $0x40] sm:$0xff]
      %v638 = vld [vmem:[%s3 + $0x48] sm:$0xff]
      %v639 = vld [vmem:[%s3 + $0x50] sm:$0xff]
      %v640 = vld [vmem:[%s3 + $0x58] sm:$0xff]
      %v641 = vld [vmem:[%s3 + $0x60] sm:$0xff]
      %v642 = vld [vmem:[%s3 + $0x68] sm:$0xff]
      %v643 = vld [vmem:[%s3 + $0x70] sm:$0xff]
      %v644 = vld [vmem:[%s3 + $0x78] sm:$0xff]
      %v645 = vld [vmem:[%s3 + $0x80] sm:$0xff]
      %v646 = vld [vmem:[%s3 + $0x88] sm:$0xff]
      %v647 = vld [vmem:[%s3 + $0x90] sm:$0xff]
      %v648 = vld [vmem:[%s3 + $0x98] sm:$0xff]
      %v649 = vld [vmem:[%s3 + $0xa0] sm:$0xff]
      %v650 = vld [vmem:[%s3 + $0xa8] sm:$0xff]
      %v651 = vld [vmem:[%s3 + $0xb0] sm:$0xff]
      %v652 = vld [vmem:[%s3 + $0xb8] sm:$0xff]
      %v653 = vld [vmem:[%s3 + $0xc0] sm:$0xff]
      %v654 = vld [vmem:[%s3 + $0xc8] sm:$0xff]
      %v655 = vld [vmem:[%s3 + $0xd0] sm:$0xff]
      %v656 = vld [vmem:[%s3 + $0xd8] sm:$0xff]
      %v657 = vld [vmem:[%s3 + $0xe0] sm:$0xff]
      %v658 = vld [vmem:[%s3 + $0xe8] sm:$0xff]
      %v659 = vld [vmem:[%s3 + $0xf0] sm:$0xff]
      %v660 = vld [vmem:[%s3 + $0xf8] sm:$0xff]
      %s661 = scalar_lea.vmem %s3, 256
      %v662 = vld [vmem:[%s661] sm:$0xff]
      %v663 = vld [vmem:[%s661 + $0x8] sm:$0xff]
      %v664 = vld [vmem:[%s661 + $0x10] sm:$0xff]
      %v665 = vld [vmem:[%s661 + $0x18] sm:$0xff]
      %v666 = vld [vmem:[%s661 + $0x20] sm:$0xff]
      %v667 = vld [vmem:[%s661 + $0x28] sm:$0xff]
      %v668 = vld [vmem:[%s661 + $0x30] sm:$0xff]
      %v669 = vld [vmem:[%s661 + $0x38] sm:$0xff]
      %v670 = vld [vmem:[%s661 + $0x40] sm:$0xff]
      %v671 = vld [vmem:[%s661 + $0x48] sm:$0xff]
      %v672 = vld [vmem:[%s661 + $0x50] sm:$0xff]
      %v673 = vld [vmem:[%s661 + $0x58] sm:$0xff]
      %v674 = vld [vmem:[%s661 + $0x60] sm:$0xff]
      %v675 = vld [vmem:[%s661 + $0x68] sm:$0xff]
      %v676 = vld [vmem:[%s661 + $0x70] sm:$0xff]
      %v677 = vld [vmem:[%s661 + $0x78] sm:$0xff]
      %v678 = vld [vmem:[%s661 + $0x80] sm:$0xff]
      %v679 = vld [vmem:[%s661 + $0x88] sm:$0xff]
      %v680 = vld [vmem:[%s661 + $0x90] sm:$0xff]
      %v681 = vld [vmem:[%s661 + $0x98] sm:$0xff]
      %v682 = vld [vmem:[%s661 + $0xa0] sm:$0xff]
      %v683 = vld [vmem:[%s661 + $0xa8] sm:$0xff]
      %v684 = vld [vmem:[%s661 + $0xb0] sm:$0xff]
      %v685 = vld [vmem:[%s661 + $0xb8] sm:$0xff]
      %v686 = vld [vmem:[%s661 + $0xc0] sm:$0xff]
      %v687 = vld [vmem:[%s661 + $0xc8] sm:$0xff]
      %v688 = vld [vmem:[%s661 + $0xd0] sm:$0xff]
      %v689 = vld [vmem:[%s661 + $0xd8] sm:$0xff]
      %v690 = vld [vmem:[%s661 + $0xe0] sm:$0xff]
      %v691 = vld [vmem:[%s661 + $0xe8] sm:$0xff]
      %v692 = vld [vmem:[%s661 + $0xf0] sm:$0xff]
      %v693 = vld [vmem:[%s661 + $0xf8] sm:$0xff]
      %694 = vmatprep.subr.mxu0 %v693
      %695 = vmatpush1.msra.mxu0 %v692
      %696 = vmatprep.subr.mxu0 %v691
      %697 = vmatpush1.msra.mxu0 %v690
      %698 = vmatprep.subr.mxu0 %v689
      %699 = vmatpush1.msra.mxu0 %v688
      %700 = vmatprep.subr.mxu0 %v687
      %701 = vmatpush1.msra.mxu0 %v686
      %702 = vmatprep.subr.mxu0 %v685
      %703 = vmatpush1.msra.mxu0 %v684
      %704 = vmatprep.subr.mxu0 %v683
      %705 = vmatpush1.msra.mxu0 %v682
      %706 = vmatprep.subr.mxu0 %v681
      %707 = vmatpush1.msra.mxu0 %v680
      %708 = vmatprep.subr.mxu0 %v679
      %709 = vmatpush1.msra.mxu0 %v678
      %710 = vmatprep.subr.mxu0 %v677
      %711 = vmatpush1.msra.mxu0 %v676
      %712 = vmatprep.subr.mxu0 %v675
      %713 = vmatpush1.msra.mxu0 %v674
      %714 = vmatprep.subr.mxu0 %v673
      %715 = vmatpush1.msra.mxu0 %v672
      %716 = vmatprep.subr.mxu0 %v671
      %717 = vmatpush1.msra.mxu0 %v670
      %718 = vmatprep.subr.mxu0 %v669
      %719 = vmatpush1.msra.mxu0 %v668
      %720 = vmatprep.subr.mxu0 %v667
      %721 = vmatpush1.msra.mxu0 %v666
      %722 = vmatprep.subr.mxu0 %v665
      %723 = vmatpush1.msra.mxu0 %v664
      %724 = vmatprep.subr.mxu0 %v663
      %725 = vmatpush1.msra.mxu0 %v662
      %726 = vmatprep.subr.mxu0 0.0
      %727 = vmatpush2.msra.mxu0 0.0
      %728 = vmatprep.subr.mxu0 0.0
      %729 = vmatpush2.msra.mxu0 0.0
      %730 = vmatprep.subr.mxu0 0.0
      %731 = vmatpush2.msra.mxu0 0.0
      %732 = vmatprep.subr.mxu0 0.0
      %733 = vmatpush2.msra.mxu0 0.0
      %734 = vmatprep.subr.mxu0 0.0
      %735 = vmatpush2.msra.mxu0 0.0
      %736 = vmatprep.subr.mxu0 0.0
      %737 = vmatpush2.msra.mxu0 0.0
      %738 = vmatprep.subr.mxu0 0.0
      %739 = vmatpush2.msra.mxu0 0.0
      %740 = vmatprep.subr.mxu0 0.0
      %741 = vmatpush2.msra.mxu0 0.0
      %742 = vmatprep.subr.mxu0 0.0
      %743 = vmatpush2.msra.mxu0 0.0
      %744 = vmatprep.subr.mxu0 0.0
      %745 = vmatpush2.msra.mxu0 0.0
      %746 = vmatprep.subr.mxu0 0.0
      %747 = vmatpush2.msra.mxu0 0.0
      %748 = vmatprep.subr.mxu0 0.0
      %749 = vmatpush2.msra.mxu0 0.0
      %750 = vmatprep.subr.mxu0 0.0
      %751 = vmatpush2.msra.mxu0 0.0
      %752 = vmatprep.subr.mxu0 0.0
      %753 = vmatpush2.msra.mxu0 0.0
      %754 = vmatprep.subr.mxu0 0.0
      %755 = vmatpush2.msra.mxu0 0.0
      %756 = vmatprep.subr.mxu0 0.0
      %757 = vmatpush2.msra.mxu0 0.0
      %758 = vmatprep.mubr.f32.mxu0 0.0
      %759 = vmatmul.mubr.f32.gmra.mxu0 %v601
      %v760 = vpop.f32.mrf.mxu0
      %v761 = vadd.f32 0.0, %v760
      %v762 = vpop.f32.mrf.mxu0
      %v763 = vadd.f32 0.0, %v762
      %764 = vmatprep.mubr.f32.mxu0 0.0
      %765 = vmatmul.mubr.f32.gmra.mxu0 %v602
      %v766 = vpop.f32.mrf.mxu0
      %v767 = vadd.f32 0.0, %v766
      %v768 = vpop.f32.mrf.mxu0
      %v769 = vadd.f32 0.0, %v768
      %770 = vmatprep.mubr.f32.mxu0 0.0
      %771 = vmatmul.mubr.f32.gmra.mxu0 %v603
      %v772 = vpop.f32.mrf.mxu0
      %v773 = vadd.f32 0.0, %v772
      %v774 = vpop.f32.mrf.mxu0
      %v775 = vadd.f32 0.0, %v774
      %776 = vmatprep.mubr.f32.mxu0 0.0
      %777 = vmatmul.mubr.f32.gmra.mxu0 %v604
      %v778 = vpop.f32.mrf.mxu0
      %v779 = vadd.f32 0.0, %v778
      %v780 = vpop.f32.mrf.mxu0
      %v781 = vadd.f32 0.0, %v780
      %782 = vdwg.mxu0
      %783 = vmatprep.subr.mxu0 %v660
      %784 = vmatpush1.msra.mxu0 %v659
      %785 = vmatprep.subr.mxu0 %v658
      %786 = vmatpush1.msra.mxu0 %v657
      %787 = vmatprep.subr.mxu0 %v656
      %788 = vmatpush1.msra.mxu0 %v655
      %789 = vmatprep.subr.mxu0 %v654
      %790 = vmatpush1.msra.mxu0 %v653
      %791 = vmatprep.subr.mxu0 %v652
      %792 = vmatpush1.msra.mxu0 %v651
      %793 = vmatprep.subr.mxu0 %v650
      %794 = vmatpush1.msra.mxu0 %v649
      %795 = vmatprep.subr.mxu0 %v648
      %796 = vmatpush1.msra.mxu0 %v647
      %797 = vmatprep.subr.mxu0 %v646
      %798 = vmatpush1.msra.mxu0 %v645
      %799 = vmatprep.subr.mxu0 %v644
      %800 = vmatpush1.msra.mxu0 %v643
      %801 = vmatprep.subr.mxu0 %v642
      %802 = vmatpush1.msra.mxu0 %v641
      %803 = vmatprep.subr.mxu0 %v640
      %804 = vmatpush1.msra.mxu0 %v639
      %805 = vmatprep.subr.mxu0 %v638
      %806 = vmatpush1.msra.mxu0 %v637
      %807 = vmatprep.subr.mxu0 %v636
      %808 = vmatpush1.msra.mxu0 %v635
      %809 = vmatprep.subr.mxu0 %v634
      %810 = vmatpush1.msra.mxu0 %v633
      %811 = vmatprep.subr.mxu0 %v632
      %812 = vmatpush1.msra.mxu0 %v631
      %813 = vmatprep.subr.mxu0 %v630
      %814 = vmatpush1.msra.mxu0 %v629
      %815 = vmatprep.subr.mxu0 0.0
      %816 = vmatpush2.msra.mxu0 0.0
      %817 = vmatprep.subr.mxu0 0.0
      %818 = vmatpush2.msra.mxu0 0.0
      %819 = vmatprep.subr.mxu0 0.0
      %820 = vmatpush2.msra.mxu0 0.0
      %821 = vmatprep.subr.mxu0 0.0
      %822 = vmatpush2.msra.mxu0 0.0
      %823 = vmatprep.subr.mxu0 0.0
      %824 = vmatpush2.msra.mxu0 0.0
      %825 = vmatprep.subr.mxu0 0.0
      %826 = vmatpush2.msra.mxu0 0.0
      %827 = vmatprep.subr.mxu0 0.0
      %828 = vmatpush2.msra.mxu0 0.0
      %829 = vmatprep.subr.mxu0 0.0
      %830 = vmatpush2.msra.mxu0 0.0
      %831 = vmatprep.subr.mxu0 0.0
      %832 = vmatpush2.msra.mxu0 0.0
      %833 = vmatprep.subr.mxu0 0.0
      %834 = vmatpush2.msra.mxu0 0.0
      %835 = vmatprep.subr.mxu0 0.0
      %836 = vmatpush2.msra.mxu0 0.0
      %837 = vmatprep.subr.mxu0 0.0
      %838 = vmatpush2.msra.mxu0 0.0
      %839 = vmatprep.subr.mxu0 0.0
      %840 = vmatpush2.msra.mxu0 0.0
      %841 = vmatprep.subr.mxu0 0.0
      %842 = vmatpush2.msra.mxu0 0.0
      %843 = vmatprep.subr.mxu0 0.0
      %844 = vmatpush2.msra.mxu0 0.0
      %845 = vmatprep.subr.mxu0 0.0
      %846 = vmatpush2.msra.mxu0 0.0
      %847 = vmatprep.mubr.f32.mxu0 0.0
      %848 = vmatmul.mubr.f32.gmra.mxu0 %v613
      %v849 = vpop.f32.mrf.mxu0
      %v850 = vadd.f32 %v761, %v849
      %v851 = vpop.f32.mrf.mxu0
      %v852 = vadd.f32 %v763, %v851
      %853 = vmatprep.mubr.f32.mxu0 0.0
      %854 = vmatmul.mubr.f32.gmra.mxu0 %v614
      %v855 = vpop.f32.mrf.mxu0
      %v856 = vadd.f32 %v767, %v855
      %v857 = vpop.f32.mrf.mxu0
      %v858 = vadd.f32 %v769, %v857
      %859 = vmatprep.mubr.f32.mxu0 0.0
      %860 = vmatmul.mubr.f32.gmra.mxu0 %v615
      %v861 = vpop.f32.mrf.mxu0
      %v862 = vadd.f32 %v773, %v861
      %v863 = vpop.f32.mrf.mxu0
      %v864 = vadd.f32 %v775, %v863
      %865 = vmatprep.mubr.f32.mxu0 0.0
      %866 = vmatmul.mubr.f32.gmra.mxu0 %v616
      %v867 = vpop.f32.mrf.mxu0
      %v868 = vadd.f32 %v779, %v867
      %v869 = vpop.f32.mrf.mxu0
      %v870 = vadd.f32 %v781, %v869
      %871 = vdwg.mxu0
      %s872 = scalar_lea.vmem %s3, 512
      %v873 = vld [vmem:[%s872] sm:$0xff]
      %v874 = vld [vmem:[%s872 + $0x8] sm:$0xff]
      %v875 = vld [vmem:[%s872 + $0x10] sm:$0xff]
      %v876 = vld [vmem:[%s872 + $0x18] sm:$0xff]
      %v877 = vld [vmem:[%s872 + $0x20] sm:$0xff]
      %v878 = vld [vmem:[%s872 + $0x28] sm:$0xff]
      %v879 = vld [vmem:[%s872 + $0x30] sm:$0xff]
      %v880 = vld [vmem:[%s872 + $0x38] sm:$0xff]
      %v881 = vld [vmem:[%s872 + $0x40] sm:$0xff]
      %v882 = vld [vmem:[%s872 + $0x48] sm:$0xff]
      %v883 = vld [vmem:[%s872 + $0x50] sm:$0xff]
      %v884 = vld [vmem:[%s872 + $0x58] sm:$0xff]
      %v885 = vld [vmem:[%s872 + $0x60] sm:$0xff]
      %v886 = vld [vmem:[%s872 + $0x68] sm:$0xff]
      %v887 = vld [vmem:[%s872 + $0x70] sm:$0xff]
      %v888 = vld [vmem:[%s872 + $0x78] sm:$0xff]
      %v889 = vld [vmem:[%s872 + $0x80] sm:$0xff]
      %v890 = vld [vmem:[%s872 + $0x88] sm:$0xff]
      %v891 = vld [vmem:[%s872 + $0x90] sm:$0xff]
      %v892 = vld [vmem:[%s872 + $0x98] sm:$0xff]
      %v893 = vld [vmem:[%s872 + $0xa0] sm:$0xff]
      %v894 = vld [vmem:[%s872 + $0xa8] sm:$0xff]
      %v895 = vld [vmem:[%s872 + $0xb0] sm:$0xff]
      %v896 = vld [vmem:[%s872 + $0xb8] sm:$0xff]
      %v897 = vld [vmem:[%s872 + $0xc0] sm:$0xff]
      %v898 = vld [vmem:[%s872 + $0xc8] sm:$0xff]
      %v899 = vld [vmem:[%s872 + $0xd0] sm:$0xff]
      %v900 = vld [vmem:[%s872 + $0xd8] sm:$0xff]
      %v901 = vld [vmem:[%s872 + $0xe0] sm:$0xff]
      %v902 = vld [vmem:[%s872 + $0xe8] sm:$0xff]
      %v903 = vld [vmem:[%s872 + $0xf0] sm:$0xff]
      %v904 = vld [vmem:[%s872 + $0xf8] sm:$0xff]
      %905 = vmatprep.subr.mxu0 %v904
      %906 = vmatpush1.msra.mxu0 %v903
      %907 = vmatprep.subr.mxu0 %v902
      %908 = vmatpush1.msra.mxu0 %v901
      %909 = vmatprep.subr.mxu0 %v900
      %910 = vmatpush1.msra.mxu0 %v899
      %911 = vmatprep.subr.mxu0 %v898
      %912 = vmatpush1.msra.mxu0 %v897
      %913 = vmatprep.subr.mxu0 %v896
      %914 = vmatpush1.msra.mxu0 %v895
      %915 = vmatprep.subr.mxu0 %v894
      %916 = vmatpush1.msra.mxu0 %v893
      %917 = vmatprep.subr.mxu0 %v892
      %918 = vmatpush1.msra.mxu0 %v891
      %919 = vmatprep.subr.mxu0 %v890
      %920 = vmatpush1.msra.mxu0 %v889
      %921 = vmatprep.subr.mxu0 %v888
      %922 = vmatpush1.msra.mxu0 %v887
      %923 = vmatprep.subr.mxu0 %v886
      %924 = vmatpush1.msra.mxu0 %v885
      %925 = vmatprep.subr.mxu0 %v884
      %926 = vmatpush1.msra.mxu0 %v883
      %927 = vmatprep.subr.mxu0 %v882
      %928 = vmatpush1.msra.mxu0 %v881
      %929 = vmatprep.subr.mxu0 %v880
      %930 = vmatpush1.msra.mxu0 %v879
      %931 = vmatprep.subr.mxu0 %v878
      %932 = vmatpush1.msra.mxu0 %v877
      %933 = vmatprep.subr.mxu0 %v876
      %934 = vmatpush1.msra.mxu0 %v875
      %935 = vmatprep.subr.mxu0 %v874
      %936 = vmatpush1.msra.mxu0 %v873
      %937 = vmatprep.subr.mxu0 0.0
      %938 = vmatpush2.msra.mxu0 0.0
      %939 = vmatprep.subr.mxu0 0.0
      %940 = vmatpush2.msra.mxu0 0.0
      %941 = vmatprep.subr.mxu0 0.0
      %942 = vmatpush2.msra.mxu0 0.0
      %943 = vmatprep.subr.mxu0 0.0
      %944 = vmatpush2.msra.mxu0 0.0
      %945 = vmatprep.subr.mxu0 0.0
      %946 = vmatpush2.msra.mxu0 0.0
      %947 = vmatprep.subr.mxu0 0.0
      %948 = vmatpush2.msra.mxu0 0.0
      %949 = vmatprep.subr.mxu0 0.0
      %950 = vmatpush2.msra.mxu0 0.0
      %951 = vmatprep.subr.mxu0 0.0
      %952 = vmatpush2.msra.mxu0 0.0
      %953 = vmatprep.subr.mxu0 0.0
      %954 = vmatpush2.msra.mxu0 0.0
      %955 = vmatprep.subr.mxu0 0.0
      %956 = vmatpush2.msra.mxu0 0.0
      %957 = vmatprep.subr.mxu0 0.0
      %958 = vmatpush2.msra.mxu0 0.0
      %959 = vmatprep.subr.mxu0 0.0
      %960 = vmatpush2.msra.mxu0 0.0
      %961 = vmatprep.subr.mxu0 0.0
      %962 = vmatpush2.msra.mxu0 0.0
      %963 = vmatprep.subr.mxu0 0.0
      %964 = vmatpush2.msra.mxu0 0.0
      %965 = vmatprep.subr.mxu0 0.0
      %966 = vmatpush2.msra.mxu0 0.0
      %967 = vmatprep.subr.mxu0 0.0
      %968 = vmatpush2.msra.mxu0 0.0
      %969 = vmatprep.mubr.f32.mxu0 0.0
      %970 = vmatmul.mubr.f32.gmra.mxu0 %v625
      %v971 = vpop.f32.mrf.mxu0
      %v972 = vadd.f32 0.0, %v971
      %v973 = vpop.f32.mrf.mxu0
      %v974 = vadd.f32 0.0, %v973
      %975 = vmatprep.mubr.f32.mxu0 0.0
      %976 = vmatmul.mubr.f32.gmra.mxu0 %v626
      %v977 = vpop.f32.mrf.mxu0
      %v978 = vadd.f32 0.0, %v977
      %v979 = vpop.f32.mrf.mxu0
      %v980 = vadd.f32 0.0, %v979
      %981 = vmatprep.mubr.f32.mxu0 0.0
      %982 = vmatmul.mubr.f32.gmra.mxu0 %v627
      %v983 = vpop.f32.mrf.mxu0
      %v984 = vadd.f32 0.0, %v983
      %v985 = vpop.f32.mrf.mxu0
      %v986 = vadd.f32 0.0, %v985
      %987 = vmatprep.mubr.f32.mxu0 0.0
      %988 = vmatmul.mubr.f32.gmra.mxu0 %v628
      %v989 = vpop.f32.mrf.mxu0
      %v990 = vadd.f32 0.0, %v989
      %v991 = vpop.f32.mrf.mxu0
      %v992 = vadd.f32 0.0, %v991
      %993 = vdwg.mxu0
      %v994 = vadd.f32 %v850, %v972
      %v995 = vadd.f32 %v852, %v974
      %v996 = vadd.f32 %v856, %v978
      %v997 = vadd.f32 %v858, %v980
      %v998 = vadd.f32 %v862, %v984
      %v999 = vadd.f32 %v864, %v986
      %v1000 = vadd.f32 %v868, %v990
      %v1001 = vadd.f32 %v870, %v992
      %v1002 = vld [vmem:[%s4] sm:$0x3]
      %v1004 = vlaneseq
      %v1005 = vshrl.u32 %v1004, 7
      %v1006 = vsub.s32 0, %v1005
      %v1007 = vrot.slane %v1002, %v1006
      %v1008 = vlaneseq
      %v1009 = vshrl.u32 %v1008, 7
      %v1010 = vsub.s32 1, %v1009
      %v1011 = vrot.slane %v1002, %v1010
      %v1014 = vadd.f32 %v994, %v1007
      %v1015 = vadd.f32 %v995, %v1011
      %v1016 = vadd.f32 %v996, %v1007
      %v1017 = vadd.f32 %v997, %v1011
      %v1018 = vadd.f32 %v998, %v1007
      %v1019 = vadd.f32 %v999, %v1011
      %v1020 = vadd.f32 %v1000, %v1007
      %v1021 = vadd.f32 %v1001, %v1011
      %v1022 = vmax.f32 %v1014, 0.0
      %v1023 = vmax.f32 %v1015, 0.0
      %v1024 = vmax.f32 %v1016, 0.0
      %v1025 = vmax.f32 %v1017, 0.0
      %v1026 = vmax.f32 %v1018, 0.0
      %v1027 = vmax.f32 %v1019, 0.0
      %v1028 = vmax.f32 %v1020, 0.0
      %v1029 = vmax.f32 %v1021, 0.0
      %1030 = vst [vmem:[%s224] sm:$0xff] %v1022
      %1031 = vst [vmem:[%s224 + $0x8] sm:$0xff] %v1023
      %1032 = vst [vmem:[%s224 + $0x10] sm:$0xff] %v1024
      %1033 = vst [vmem:[%s224 + $0x18] sm:$0xff] %v1025
      %1034 = vst [vmem:[%s224 + $0x20] sm:$0xff] %v1026
      %1035 = vst [vmem:[%s224 + $0x28] sm:$0xff] %v1027
      %1036 = vst [vmem:[%s224 + $0x30] sm:$0xff] %v1028
      %1037 = vst [vmem:[%s224 + $0x38] sm:$0xff] %v1029
      %p1038 = scmp.lt.s32.totalorder %s16, 1
      %s1039 = scalar_select %p1038, %s16, 1
      %s1040 = smul.addr %s1039, 8
      %s1041 = smul.addr %s1040, 8
      %s1042 = scalar_lea.vmem %s5, %s1041
      // Predicated region
      $region41: #{segnet_up2.1} parent=39 // pred_check
        %p1043 = pneg %p144
      $region42: #{segnet_up2.1} parent=39 // pred_check_branch
        %1045 = sbr.rel (%p1043) target = $region44
      $region43: #{segnet_up2.1} parent=39 // pred_region
        _
      $region44: #{segnet_up2.1} parent=39 // pred_fallthru
        _
    $region40: #{segnet_up2.1} parent=5 // pred_fallthru
      _
    %p1046 = scmp.le.s32.totalorder 2, %s11
    // Predicated region
    $region45: #{segnet_up2.1} parent=5 // pred_check
      %p1047 = pneg %p1046
    $region46: #{segnet_up2.1} parent=5 // pred_check_branch
      %1049 = sbr.rel (%p1047) target = $region48
    $region47: #{segnet_up2.1} parent=5 // pred_region
      %s1050 = ssub.s32 %s11, 2
      // Predicated region
      $region49: #{segnet_up2.1} parent=47 // pred_check
        %p1051 = pneg %p150
      $region50: #{segnet_up2.1} parent=47 // pred_check_branch
        %1053 = sbr.rel (%p1051) target = $region52
      $region51: #{segnet_up2.1} parent=47 // pred_region
        %p1054 = scmp.lt.s32.totalorder %s17, 1
        %s1055 = scalar_select %p1054, %s17, 1
        %s1056 = smul.addr %s1055, 8
        %s1057 = smul.addr %s1056, 8
        %s1058 = scalar_lea.vmem %s5, %s1057
      $region52: #{segnet_up2.1} parent=47 // pred_fallthru
        _
    $region48: #{segnet_up2.1} parent=5 // pred_fallthru
      _
  $region6: #{segnet_up2.1} parent=0 // loop_footer
    %s15 = sadd.s32 1, %s11
  $region7: #{segnet_up2.1} parent=0 // loop_footer_branch
    %10 = sbr.rel target = $region3
  $region8: #{segnet_up2.1} parent=0 // loop_exit
    _

</llo_original>
